<compile_context>
chip_gen: v6e
topology: v6e:2x2x1
jax: 0.10.0
libtpu: 0.0.40
codegen_flags: <defaults>
</compile_context>

<pallas_src>
import functools

import jax
import jax.numpy as jnp
from jax.experimental import pallas as pl
from jax.experimental.pallas import tpu as pltpu


# ----------------------------- Pallas kernel ------------------------------

def _fused_heads_kernel(x_ref, wconv_ref, bconv_ref, *refs,
                        H, W, n_mid, apply_csa):
    """All heads for one image.

    x_ref    : (1, (H+2)*W, KP)  bf16 -- H-padded input, kw fold in channels.
    wconv_ref: (3, KP, CMID)     bf16 -- 3x3 weights, one plane per kh.
    bconv_ref: (1, CMID)         f32
    refs     : [wmid_k, bmid_k]*n_mid, wout, bout, wc, bc, ws, bs, o_ref
    o_ref    : (1, H*W, COUT)    f32  -- fused, lane-padded head outputs.
    """
    idx = 0
    mids = []
    for _ in range(n_mid):
        mids.append((refs[idx], refs[idx + 1]))
        idx += 2
    wout_ref, bout_ref = refs[idx], refs[idx + 1]
    wc_ref, bc_ref, ws_ref, bs_ref = refs[idx + 2:idx + 6]
    o_ref = refs[idx + 6]

    HW = H * W

    # --- 3x3 conv (pad=1): three kh-shifted (HW, KP) @ (KP, CMID) MXU matmuls.
    # One slab load; kh shifts are static, sublane-aligned row slices (W%8==0).
    x = x_ref[0]                                            # ((H+2)*W, KP) bf16
    acc = jnp.dot(x[0:HW, :], wconv_ref[0],
                  preferred_element_type=jnp.float32)
    for dh in (1, 2):
        acc += jnp.dot(x[dh * W:dh * W + HW, :], wconv_ref[dh],
                       preferred_element_type=jnp.float32)
    y = jnp.maximum(acc + bconv_ref[...], 0.0)              # (HW, CMID) f32

    # --- mid 1x1 convs (block-diagonal across heads), fused ReLU.
    for wm_ref, bm_ref in mids:
        y = jnp.dot(y.astype(wm_ref.dtype), wm_ref[...],
                    preferred_element_type=jnp.float32) + bm_ref[...]
        y = jnp.maximum(y, 0.0)

    # --- out 1x1 conv (block-diagonal across heads).
    out = jnp.dot(y.astype(wout_ref.dtype), wout_ref[...],
                  preferred_element_type=jnp.float32) + bout_ref[...]

    if apply_csa:
        # CSAModuleV2 on the 'hm' channel slice.  Weights are zero outside
        # that slice, so chat = spat = 0.5 elsewhere -> exact identity on the
        # other heads' channels (and the zero-padded channels stay zero).
        pooled = jnp.mean(out, axis=0, keepdims=True)                # (1, C)
        ch = jnp.dot(pooled.astype(wc_ref.dtype), wc_ref[...],
                     preferred_element_type=jnp.float32) + bc_ref[...]
        chat = jax.nn.sigmoid(jnp.maximum(ch, 0.0))                  # (1, C)
        sp = jnp.dot(out.astype(ws_ref.dtype), ws_ref[...],
                     preferred_element_type=jnp.float32) + bs_ref[...]
        spat = jax.nn.sigmoid(sp)                                    # (HW, C)
        out = out * (chat + spat)          # = x*chat + x*spat, one less mul

    o_ref[0] = out.astype(o_ref.dtype)


# ----------------------------- model wrapper -------------------------------

class BaseModelPallas:
    """Head branches of BaseModel.forward (img2feats is abstract -> identity)."""

    LANE = 128

    def __init__(self, heads, head_convs, num_stacks, last_channel,
                 head_kernel=3, prior_bias=-4.6, key=jax.random.PRNGKey(0)):
        assert head_kernel == 3
        self.heads = dict(heads)
        self.head_order = list(self.heads.keys())
        self.num_stacks = num_stacks
        self.cin = last_channel

        self._key = key
        scale = 0.05

        def nk():
            self._key, k = jax.random.split(self._key)
            return k

        def rnd(shape):
            return scale * jax.random.normal(nk(), shape, jnp.float32)

        def is_hm(h):
            return 'hm' in h

        def default_bias(n, hm):
            # fill_fc_weights -> 0 for non-hm heads; hm heads keep a small
            # (deterministic synthetic) default init for non-out conv biases.
            if hm:
                return 0.01 * jax.random.normal(nk(), (n,), jnp.float32)
            return jnp.zeros((n,), jnp.float32)

        hcs = {h: list(head_convs[h]) for h in self.head_order}
        for h in self.head_order:
            # TODO(synk): len(head_conv)==0 branch (single 1x1 conv head) not
            # exercised by this synthetic setup.
            assert len(hcs[h]) > 0
        max_L = max(len(hcs[h]) for h in self.head_order)

        # Reference: CSAModuleV2 only when head == 'hm' and len(convs) == 1.
        self.csa_head = 'hm' if ('hm' in self.heads
                                 and len(hcs['hm']) == 1) else None

        # Identity-pad shorter chains so every head has max_L conv layers.
        # (identity 1x1 conv + ReLU on a post-ReLU activation is exact identity)
        chains, ident = {}, {}
        for h in self.head_order:
            c = list(hcs[h])
            ident[h] = [False] * len(c) + [True] * (max_L - len(c))
            chains[h] = c + [c[-1]] * (max_L - len(c))

        def offsets(widths):
            offs, t = [], 0
            for w_ in widths:
                offs.append(t)
                t += w_
            return offs, t

        level_w = [[chains[h][k] for h in self.head_order] for k in range(max_L)]
        level_off, level_tot = [], []
        for k in range(max_L):
            o, t = offsets(level_w[k])
            level_off.append(o)
            level_tot.append(t)
        cls_w = [self.heads[h] for h in self.head_order]
        cls_off, cls_tot = offsets(cls_w)
        self.cls_off = dict(zip(self.head_order, cls_off))

        pad = lambda n: ((n + self.LANE - 1) // self.LANE) * self.LANE
        Pmid = [pad(t) for t in level_tot]
        self.clsp = pad(cls_tot)

        # --- level 0: fused 3x3 conv.  kw is folded into the input-channel
        # axis, so weights are laid out (kh, 3*Cin [padded to KP], cout).
        self.kin = 3 * last_channel
        self.kin_pad = pad(self.kin)
        w0 = jnp.zeros((3, self.kin_pad, Pmid[0]), jnp.float32)
        b0 = jnp.zeros((Pmid[0],), jnp.float32)
        for hi, h in enumerate(self.head_order):
            o, c0 = level_off[0][hi], level_w[0][hi]
            w0 = w0.at[:, :self.kin, o:o + c0].set(rnd((3, self.kin, c0)))
            b0 = b0.at[o:o + c0].set(default_bias(c0, is_hm(h)))
        self.w_conv = w0.astype(jnp.bfloat16)
        self.b_conv = b0.reshape(1, -1)

        # --- mid 1x1 convs: block-diagonal per level, fused ReLU in-kernel.
        self.mids = []
        for k in range(1, max_L):
            W_ = jnp.zeros((Pmid[k - 1], Pmid[k]), jnp.float32)
            B_ = jnp.zeros((Pmid[k],), jnp.float32)
            for hi, h in enumerate(self.head_order):
                oi, ci = level_off[k - 1][hi], level_w[k - 1][hi]
                oo, co = level_off[k][hi], level_w[k][hi]
                if ident[h][k]:
                    W_ = W_.at[oi:oi + ci, oo:oo + co].set(
                        jnp.eye(ci, co, dtype=jnp.float32))
                else:
                    W_ = W_.at[oi:oi + ci, oo:oo + co].set(rnd((ci, co)))
                    B_ = B_.at[oo:oo + co].set(default_bias(co, is_hm(h)))
            self.mids.append((W_.astype(jnp.bfloat16), B_.reshape(1, -1)))

        # --- out 1x1 conv: block-diagonal into the fused, lane-padded class axis.
        Wo = jnp.zeros((Pmid[-1], self.clsp), jnp.float32)
        Bo = jnp.zeros((self.clsp,), jnp.float32)
        for hi, h in enumerate(self.head_order):
            oi, ci = level_off[-1][hi], level_w[-1][hi]
            oo, co = cls_off[hi], cls_w[hi]
            Wo = Wo.at[oi:oi + ci, oo:oo + co].set(rnd((ci, co)))
            if is_hm(h):
                Bo = Bo.at[oo:oo + co].set(
                    jnp.full((co,), prior_bias, jnp.float32))
        self.w_out = Wo.astype(jnp.bfloat16)
        self.b_out = Bo.reshape(1, -1)

        # --- CSAModuleV2 weights embedded in the padded class space.
        Wc = jnp.zeros((self.clsp, self.clsp), jnp.float32)
        Bc = jnp.zeros((self.clsp,), jnp.float32)
        Ws = jnp.zeros((self.clsp, self.clsp), jnp.float32)
        Bs = jnp.zeros((self.clsp,), jnp.float32)
        if self.csa_head is not None:
            hi = self.head_order.index(self.csa_head)
            o, c = cls_off[hi], cls_w[hi]
            Wc = Wc.at[o:o + c, o:o + c].set(rnd((c, c)))
            Bc = Bc.at[o:o + c].set(default_bias(c, True))
            Ws = Ws.at[o:o + c, o:o + c].set(rnd((c, c)))
            Bs = Bs.at[o:o + c].set(default_bias(c, True))
        self.w_ch = Wc.astype(jnp.bfloat16)
        self.b_ch = Bc.reshape(1, -1)
        self.w_sp = Ws.astype(jnp.bfloat16)
        self.b_sp = Bs.reshape(1, -1)

    # ----------------------------------------------------------------------

    def img2feats(self, x):
        # TODO(synk): img2feats/imgpre2feats are abstract (NotImplementedError)
        # in the reference BaseModel; identity features exercise the head
        # pipeline defined by this module.
        return [x]

    def _fused_heads(self, feat_nchw):
        N, C, H, W = feat_nchw.shape
        assert C == self.cin
        HW = H * W

        x = jnp.transpose(feat_nchw, (0, 2, 3, 1)).astype(jnp.bfloat16)  # NHWC
        xp = jnp.pad(x, ((0, 0), (1, 1), (1, 1), (0, 0)))
        # Fold the three kw shifts into the channel axis (lane dim): the
        # kernel's 3x3 conv then needs only one kh-shifted matmul per kh row,
        # and every in-kernel slice is a statically aligned sublane slice.
        xf = jnp.concatenate([xp[:, :, dw:dw + W, :] for dw in range(3)],
                             axis=-1)                       # (N, H+2, W, 3C)
        xf = xf.reshape(N, (H + 2) * W, self.kin)
        if self.kin_pad > self.kin:
            xf = jnp.pad(xf, ((0, 0), (0, 0), (0, self.kin_pad - self.kin)))

        n_mid = len(self.mids)
        kern = functools.partial(_fused_heads_kernel, H=H, W=W, n_mid=n_mid,
                                 apply_csa=self.csa_head is not None)

        in_specs = [
            pl.BlockSpec((1, (H + 2) * W, self.kin_pad), lambda n: (n, 0, 0)),
            pl.BlockSpec(self.w_conv.shape, lambda n: (0, 0, 0)),
            pl.BlockSpec(self.b_conv.shape, lambda n: (0, 0)),
        ]
        args = [xf, self.w_conv, self.b_conv]
        for wm, bm in self.mids:
            in_specs += [pl.BlockSpec(wm.shape, lambda n: (0, 0)),
                         pl.BlockSpec(bm.shape, lambda n: (0, 0))]
            args += [wm, bm]
        for a in (self.w_out, self.b_out, self.w_ch, self.b_ch,
                  self.w_sp, self.b_sp):
            in_specs.append(pl.BlockSpec(a.shape, lambda n: (0, 0)))
            args.append(a)

        out = pl.pallas_call(
            kern,
            out_shape=jax.ShapeDtypeStruct((N, HW, self.clsp), jnp.float32),
            grid=(N,),
            in_specs=in_specs,
            out_specs=pl.BlockSpec((1, HW, self.clsp), lambda n: (n, 0, 0)),
            compiler_params=pltpu.CompilerParams(
                dimension_semantics=("parallel",)),
        )(*args)

        z = {}
        for h in self.head_order:
            o, c = self.cls_off[h], self.heads[h]
            y = out[:, :, o:o + c].reshape(N, H, W, c)
            z[h] = jnp.transpose(y, (0, 3, 1, 2))          # back to NCHW
        return z

    def forward(self, x, pre_img=None, pre_hm=None):
        feats = self.img2feats(x)
        return [self._fused_heads(feats[s]) for s in range(self.num_stacks)]


# ----------------------------- main ---------------------------------------

if __name__ == "__main__":
    key = jax.random.PRNGKey(0)
    kx, kp = jax.random.split(key)

    # small shapes: batch=2, last_channel=32, spatial 16x16
    N, C, H, W = 2, 32, 16, 16
    heads = {'hm': 10, 'reg': 2, 'wh': 2}
    head_convs = {'hm': [32], 'reg': [32], 'wh': [32]}

    x = jax.random.normal(kx, (N, C, H, W), jnp.float32)

    model = BaseModelPallas(heads, head_convs, num_stacks=1,
                            last_channel=C, head_kernel=3,
                            prior_bias=-4.6, key=kp)

    out = model.forward(x)
    out = jax.block_until_ready(out)

    # basic sanity: shapes + finite values
    for head, classes in heads.items():
        y = out[0][head]
        assert y.shape == (N, classes, H, W), (head, y.shape)
        assert bool(jnp.all(jnp.isfinite(y)))

    print("KERNEL_OK")
</pallas_src>

<mosaic_0001>
module attributes {stable_mosaic.version = 11 : i64} {
  func.func @_fused_heads_kernel(%arg0: i32, %arg1: memref<1x288x128xbf16, #tpu.memory_space<vmem>>, %arg2: memref<3x128x128xbf16, #tpu.memory_space<vmem>>, %arg3: memref<1x128xf32, #tpu.memory_space<vmem>>, %arg4: memref<128x128xbf16, #tpu.memory_space<vmem>>, %arg5: memref<1x128xf32, #tpu.memory_space<vmem>>, %arg6: memref<128x128xbf16, #tpu.memory_space<vmem>>, %arg7: memref<1x128xf32, #tpu.memory_space<vmem>>, %arg8: memref<128x128xbf16, #tpu.memory_space<vmem>>, %arg9: memref<1x128xf32, #tpu.memory_space<vmem>>, %arg10: memref<1x256x128xf32, #tpu.memory_space<vmem>>) attributes {dimension_semantics = [#tpu.dimension_semantics<parallel>], iteration_bounds = array<i64: 2>, scalar_prefetch = 0 : i64, scratch_operands = 0 : i64, tpu.core_type = #tpu.core_type<tc>, window_params = [{transform_indices = @transform_0, window_bounds = array<i64: 1, 288, 128>}, {pipeline_mode = #tpu.pipeline_mode<synchronous>, transform_indices = @transform_1, window_bounds = array<i64: 3, 128, 128>}, {pipeline_mode = #tpu.pipeline_mode<synchronous>, transform_indices = @transform_2, window_bounds = array<i64: 1, 128>}, {pipeline_mode = #tpu.pipeline_mode<synchronous>, transform_indices = @transform_3, window_bounds = array<i64: 128, 128>}, {pipeline_mode = #tpu.pipeline_mode<synchronous>, transform_indices = @transform_4, window_bounds = array<i64: 1, 128>}, {pipeline_mode = #tpu.pipeline_mode<synchronous>, transform_indices = @transform_5, window_bounds = array<i64: 128, 128>}, {pipeline_mode = #tpu.pipeline_mode<synchronous>, transform_indices = @transform_6, window_bounds = array<i64: 1, 128>}, {pipeline_mode = #tpu.pipeline_mode<synchronous>, transform_indices = @transform_7, window_bounds = array<i64: 128, 128>}, {pipeline_mode = #tpu.pipeline_mode<synchronous>, transform_indices = @transform_8, window_bounds = array<i64: 1, 128>}, {transform_indices = @transform_9, window_bounds = array<i64: 1, 256, 128>}]} {
    %c0 = arith.constant 0 : index
    %c0_0 = arith.constant 0 : index
    %c0_1 = arith.constant 0 : index
    %0 = vector.load %arg1[%c0, %c0_0, %c0_1] : memref<1x288x128xbf16, #tpu.memory_space<vmem>>, vector<1x288x128xbf16>
    %1 = vector.shape_cast %0 : vector<1x288x128xbf16> to vector<288x128xbf16>
    %2 = vector.extract_strided_slice %1 {offsets = [0, 0], sizes = [256, 128], strides = [1, 1]} : vector<288x128xbf16> to vector<256x128xbf16>
    %c0_2 = arith.constant 0 : index
    %c0_3 = arith.constant 0 : index
    %c0_4 = arith.constant 0 : index
    %3 = vector.load %arg2[%c0_2, %c0_3, %c0_4] : memref<3x128x128xbf16, #tpu.memory_space<vmem>>, vector<1x128x128xbf16>
    %4 = vector.shape_cast %3 : vector<1x128x128xbf16> to vector<128x128xbf16>
    %cst = arith.constant dense<0.000000e+00> : vector<256x128xf32>
    %5 = tpu.matmul %2, %4, %cst {dimension_numbers = #tpu.dot_dimension_numbers<[1], [0], [0], [1], [0, 0, 1, 1], [], []>} : vector<256x128xbf16>, vector<128x128xbf16>, vector<256x128xf32> -> vector<256x128xf32>
    %6 = vector.extract_strided_slice %1 {offsets = [16, 0], sizes = [256, 128], strides = [1, 1]} : vector<288x128xbf16> to vector<256x128xbf16>
    %c1 = arith.constant 1 : index
    %c0_5 = arith.constant 0 : index
    %c0_6 = arith.constant 0 : index
    %7 = vector.load %arg2[%c1, %c0_5, %c0_6] : memref<3x128x128xbf16, #tpu.memory_space<vmem>>, vector<1x128x128xbf16>
    %8 = vector.shape_cast %7 : vector<1x128x128xbf16> to vector<128x128xbf16>
    %cst_7 = arith.constant dense<0.000000e+00> : vector<256x128xf32>
    %9 = tpu.matmul %6, %8, %cst_7 {dimension_numbers = #tpu.dot_dimension_numbers<[1], [0], [0], [1], [0, 0, 1, 1], [], []>} : vector<256x128xbf16>, vector<128x128xbf16>, vector<256x128xf32> -> vector<256x128xf32>
    %10 = arith.addf %5, %9 : vector<256x128xf32>
    %11 = vector.extract_strided_slice %1 {offsets = [32, 0], sizes = [256, 128], strides = [1, 1]} : vector<288x128xbf16> to vector<256x128xbf16>
    %c2 = arith.constant 2 : index
    %c0_8 = arith.constant 0 : index
    %c0_9 = arith.constant 0 : index
    %12 = vector.load %arg2[%c2, %c0_8, %c0_9] : memref<3x128x128xbf16, #tpu.memory_space<vmem>>, vector<1x128x128xbf16>
    %13 = vector.shape_cast %12 : vector<1x128x128xbf16> to vector<128x128xbf16>
    %cst_10 = arith.constant dense<0.000000e+00> : vector<256x128xf32>
    %14 = tpu.matmul %11, %13, %cst_10 {dimension_numbers = #tpu.dot_dimension_numbers<[1], [0], [0], [1], [0, 0, 1, 1], [], []>} : vector<256x128xbf16>, vector<128x128xbf16>, vector<256x128xf32> -> vector<256x128xf32>
    %15 = arith.addf %10, %14 : vector<256x128xf32>
    %c0_11 = arith.constant 0 : index
    %c0_12 = arith.constant 0 : index
    %16 = vector.load %arg3[%c0_11, %c0_12] : memref<1x128xf32, #tpu.memory_space<vmem>>, vector<1x128xf32>
    %17 = vector.broadcast %16 : vector<1x128xf32> to vector<256x128xf32>
    %18 = arith.addf %15, %17 : vector<256x128xf32>
    %cst_13 = arith.constant 0.000000e+00 : f32
    %19 = vector.broadcast %cst_13 : f32 to vector<256x128xf32>
    %20 = arith.maximumf %18, %19 : vector<256x128xf32>
    %21 = arith.truncf %20 : vector<256x128xf32> to vector<256x128xbf16>
    %c0_14 = arith.constant 0 : index
    %c0_15 = arith.constant 0 : index
    %22 = vector.load %arg4[%c0_14, %c0_15] : memref<128x128xbf16, #tpu.memory_space<vmem>>, vector<128x128xbf16>
    %cst_16 = arith.constant dense<0.000000e+00> : vector<256x128xf32>
    %23 = tpu.matmul %21, %22, %cst_16 {dimension_numbers = #tpu.dot_dimension_numbers<[1], [0], [0], [1], [0, 0, 1, 1], [], []>} : vector<256x128xbf16>, vector<128x128xbf16>, vector<256x128xf32> -> vector<256x128xf32>
    %c0_17 = arith.constant 0 : index
    %c0_18 = arith.constant 0 : index
    %24 = vector.load %arg5[%c0_17, %c0_18] : memref<1x128xf32, #tpu.memory_space<vmem>>, vector<1x128xf32>
    %25 = vector.broadcast %24 : vector<1x128xf32> to vector<256x128xf32>
    %26 = arith.addf %23, %25 : vector<256x128xf32>
    %cst_19 = arith.constant dense<0.000000e+00> : vector<128xf32>
    %27 = vector.multi_reduction <add>, %26, %cst_19 [0] : vector<256x128xf32> to vector<128xf32>
    %28 = vector.shape_cast %27 : vector<128xf32> to vector<1x128xf32>
    %cst_20 = arith.constant 2.560000e+02 : f32
    %29 = vector.broadcast %cst_20 : f32 to vector<1x128xf32>
    %30 = arith.divf %28, %29 : vector<1x128xf32>
    %31 = arith.truncf %30 : vector<1x128xf32> to vector<1x128xbf16>
    %c0_21 = arith.constant 0 : index
    %c0_22 = arith.constant 0 : index
    %32 = vector.load %arg6[%c0_21, %c0_22] : memref<128x128xbf16, #tpu.memory_space<vmem>>, vector<128x128xbf16>
    %cst_23 = arith.constant dense<0.000000e+00> : vector<1x128xf32>
    %33 = tpu.matmul %31, %32, %cst_23 {dimension_numbers = #tpu.dot_dimension_numbers<[1], [0], [0], [1], [0, 0, 1, 1], [], []>} : vector<1x128xbf16>, vector<128x128xbf16>, vector<1x128xf32> -> vector<1x128xf32>
    %c0_24 = arith.constant 0 : index
    %c0_25 = arith.constant 0 : index
    %34 = vector.load %arg7[%c0_24, %c0_25] : memref<1x128xf32, #tpu.memory_space<vmem>>, vector<1x128xf32>
    %35 = arith.addf %33, %34 : vector<1x128xf32>
    %cst_26 = arith.constant 0.000000e+00 : f32
    %36 = vector.broadcast %cst_26 : f32 to vector<1x128xf32>
    %37 = arith.maximumf %35, %36 : vector<1x128xf32>
    %38 = arith.negf %37 : vector<1x128xf32>
    %39 = math.exp %38 : vector<1x128xf32>
    %cst_27 = arith.constant 1.000000e+00 : f32
    %40 = vector.broadcast %cst_27 : f32 to vector<1x128xf32>
    %41 = arith.addf %40, %39 : vector<1x128xf32>
    %42 = arith.divf %40, %41 : vector<1x128xf32>
    %43 = arith.truncf %26 : vector<256x128xf32> to vector<256x128xbf16>
    %c0_28 = arith.constant 0 : index
    %c0_29 = arith.constant 0 : index
    %44 = vector.load %arg8[%c0_28, %c0_29] : memref<128x128xbf16, #tpu.memory_space<vmem>>, vector<128x128xbf16>
    %cst_30 = arith.constant dense<0.000000e+00> : vector<256x128xf32>
    %45 = tpu.matmul %43, %44, %cst_30 {dimension_numbers = #tpu.dot_dimension_numbers<[1], [0], [0], [1], [0, 0, 1, 1], [], []>} : vector<256x128xbf16>, vector<128x128xbf16>, vector<256x128xf32> -> vector<256x128xf32>
    %c0_31 = arith.constant 0 : index
    %c0_32 = arith.constant 0 : index
    %46 = vector.load %arg9[%c0_31, %c0_32] : memref<1x128xf32, #tpu.memory_space<vmem>>, vector<1x128xf32>
    %47 = vector.broadcast %46 : vector<1x128xf32> to vector<256x128xf32>
    %48 = arith.addf %45, %47 : vector<256x128xf32>
    %49 = arith.negf %48 : vector<256x128xf32>
    %50 = math.exp %49 : vector<256x128xf32>
    %cst_33 = arith.constant 1.000000e+00 : f32
    %51 = vector.broadcast %cst_33 : f32 to vector<256x128xf32>
    %52 = arith.addf %51, %50 : vector<256x128xf32>
    %53 = arith.divf %51, %52 : vector<256x128xf32>
    %54 = vector.broadcast %42 : vector<1x128xf32> to vector<256x128xf32>
    %55 = arith.addf %54, %53 : vector<256x128xf32>
    %56 = arith.mulf %26, %55 : vector<256x128xf32>
    %c0_34 = arith.constant 0 : index
    %c0_35 = arith.constant 0 : index
    %c0_36 = arith.constant 0 : index
    %57 = vector.load %arg10[%c0_34, %c0_35, %c0_36] : memref<1x256x128xf32, #tpu.memory_space<vmem>>, vector<1x256x128xf32>
    %58 = vector.shape_cast %57 : vector<1x256x128xf32> to vector<256x128xf32>
    %59 = vector.shape_cast %56 : vector<256x128xf32> to vector<1x256x128xf32>
    tpu.vector_store %arg10[%c0_34, %c0_35, %c0_36], %59 {strides = array<i32>} : memref<1x256x128xf32, #tpu.memory_space<vmem>>, vector<1x256x128xf32>,
    return
  }
  func.func @transform_0(%arg0: i32) -> (i32, i32, i32) {
    %c0_i32 = arith.constant 0 : i32
    %c0_i32_0 = arith.constant 0 : i32
    %c0_i32_1 = arith.constant 0 : i32
    return %arg0, %c0_i32, %c0_i32_0 : i32, i32, i32
  }
  func.func @transform_1(%arg0: i32) -> (i32, i32, i32) {
    %c0_i32 = arith.constant 0 : i32
    %c0_i32_0 = arith.constant 0 : i32
    %c0_i32_1 = arith.constant 0 : i32
    %c0_i32_2 = arith.constant 0 : i32
    return %c0_i32, %c0_i32_0, %c0_i32_1 : i32, i32, i32
  }
  func.func @transform_2(%arg0: i32) -> (i32, i32) {
    %c0_i32 = arith.constant 0 : i32
    %c0_i32_0 = arith.constant 0 : i32
    %c0_i32_1 = arith.constant 0 : i32
    return %c0_i32, %c0_i32_0 : i32, i32
  }
  func.func @transform_3(%arg0: i32) -> (i32, i32) {
    %c0_i32 = arith.constant 0 : i32
    %c0_i32_0 = arith.constant 0 : i32
    %c0_i32_1 = arith.constant 0 : i32
    return %c0_i32, %c0_i32_0 : i32, i32
  }
  func.func @transform_4(%arg0: i32) -> (i32, i32) {
    %c0_i32 = arith.constant 0 : i32
    %c0_i32_0 = arith.constant 0 : i32
    %c0_i32_1 = arith.constant 0 : i32
    return %c0_i32, %c0_i32_0 : i32, i32
  }
  func.func @transform_5(%arg0: i32) -> (i32, i32) {
    %c0_i32 = arith.constant 0 : i32
    %c0_i32_0 = arith.constant 0 : i32
    %c0_i32_1 = arith.constant 0 : i32
    return %c0_i32, %c0_i32_0 : i32, i32
  }
  func.func @transform_6(%arg0: i32) -> (i32, i32) {
    %c0_i32 = arith.constant 0 : i32
    %c0_i32_0 = arith.constant 0 : i32
    %c0_i32_1 = arith.constant 0 : i32
    return %c0_i32, %c0_i32_0 : i32, i32
  }
  func.func @transform_7(%arg0: i32) -> (i32, i32) {
    %c0_i32 = arith.constant 0 : i32
    %c0_i32_0 = arith.constant 0 : i32
    %c0_i32_1 = arith.constant 0 : i32
    return %c0_i32, %c0_i32_0 : i32, i32
  }
  func.func @transform_8(%arg0: i32) -> (i32, i32) {
    %c0_i32 = arith.constant 0 : i32
    %c0_i32_0 = arith.constant 0 : i32
    %c0_i32_1 = arith.constant 0 : i32
    return %c0_i32, %c0_i32_0 : i32, i32
  }
  func.func @transform_9(%arg0: i32) -> (i32, i32, i32) {
    %c0_i32 = arith.constant 0 : i32
    %c0_i32_0 = arith.constant 0 : i32
    %c0_i32_1 = arith.constant 0 : i32
    return %arg0, %c0_i32, %c0_i32_0 : i32, i32, i32
  }
}

</mosaic_0001>

<llo_original>
// kernel: tpu_custom_call.1
$region0: #{tpu_custom_call.1}
  #allocation0 [shape = 'u32[]', space=smem, size = 0x4, offset = 0x4, fixed_abs, tag = 'smem constant byte address 0x4 - core index']
  #allocation1 [shape = 'u32[144,128]{1,0:T(1,128)}', space=vmem, size = 0x12000, scoped, tag = 'internal scratch']
  %s0 = inlined_call_operand.hbm [shape: bf16[2,288,128], index: 0, kind: input, shape index: {}]
  %s1 = inlined_call_operand.hbm [shape: bf16[3,128,128], index: 1, kind: input, shape index: {}]
  %s2 = inlined_call_operand.vmem [shape: f32[1,128], index: 2, kind: input, shape index: {}]
  %s3 = inlined_call_operand.hbm [shape: bf16[128,128], index: 3, kind: input, shape index: {}]
  %s4 = inlined_call_operand.vmem [shape: f32[1,128], index: 4, kind: input, shape index: {}]
  %s5 = inlined_call_operand.hbm [shape: bf16[128,128], index: 5, kind: input, shape index: {}]
  %s6 = inlined_call_operand.vmem [shape: f32[1,128], index: 6, kind: input, shape index: {}]
  %s7 = inlined_call_operand.hbm [shape: bf16[128,128], index: 7, kind: input, shape index: {}]
  %s8 = inlined_call_operand.vmem [shape: f32[1,128], index: 8, kind: input, shape index: {}]
  %s9 = inlined_call_operand.hbm [shape: f32[2,256,128], index: 9, kind: output, shape index: {}]
  %s10 = sld [smem:[#allocation0]]
  $region89: #{tpu_custom_call.1} parent=0
    _
  %s12 = ssub.s32 1, %s10
  %s13 = scalar_select 0, %s12, %s10
  $region1: #{tpu_custom_call.1} parent=0
    #allocation2 [shape = 'u8[147456]{0}', space=vmem, size = 0x24000, scoped, tag = 'input window, operand 0']
    #allocation3 [shape = 's32[2]{0}', space=sflag, size = 0x8, scoped, tag = 'scoped memory for tpu_custom_call.1']
    #allocation4 [shape = 's32[2]{0}', space=sflag, size = 0x8, scoped, tag = 'scoped memory for tpu_custom_call.1']
    #allocation5 [shape = 'u8[98304]{0}', space=vmem, size = 0x18000, scoped, tag = 'input window, operand 1, single buffered']
    #allocation6 [shape = 's32[1]{0}', space=sflag, size = 0x4, scoped, tag = 'scoped memory for tpu_custom_call.1']
    #allocation7 [shape = 'u8[32768]{0}', space=vmem, size = 0x8000, scoped, tag = 'input window, operand 3, single buffered']
    #allocation8 [shape = 'u8[32768]{0}', space=vmem, size = 0x8000, scoped, tag = 'input window, operand 5, single buffered']
    #allocation9 [shape = 's32[1]{0}', space=sflag, size = 0x4, scoped, tag = 'scoped memory for tpu_custom_call.1']
    #allocation10 [shape = 'u8[32768]{0}', space=vmem, size = 0x8000, scoped, tag = 'input window, operand 7, single buffered']
    #allocation11 [shape = 'u8[262144]{0}', space=vmem, size = 0x40000, scoped, tag = 'output window, operand 0']
    %14 = vsyncpa [#allocation3], 0
    %s15 = scalar_lea.sflag [#allocation3], 1
    %16 = vsyncpa %s15, 0
    %17 = vsyncpa [#allocation6], 0
    %18 = vsyncpa [#allocation9], 0
    %19 = vsyncpa [#allocation4], 0
    %s20 = scalar_lea.sflag [#allocation4], 1
    %21 = vsyncpa %s20, 0
    loop: start=0, step=1, limit=4
    $region2: #{tpu_custom_call.1} parent=1 // loop_pre_header
      _
    $region3: #{tpu_custom_call.1} parent=1 // loop_header
      %s23 = sphi 0, %s27
      %p24 = scmp.ge.s32.totalorder %s23, 4
      %s33 = sphi 0, %s35
      %s36 = sphi 0, %s33
      %s37 = sphi 0, %s36
      %s53 = sphi 0, %s37
      %s57 = sphi 0, %s57
      %s59 = sphi 0, %s57
      %s60 = sphi 0, %s59
      %s74 = sphi 0, %s60
      %s78 = sphi 0, %s78
      %s80 = sphi 0, %s78
      %s81 = sphi 0, %s80
      %s95 = sphi 0, %s81
      %s99 = sphi 0, %s99
      %s101 = sphi 0, %s99
      %s102 = sphi 0, %s101
      %s116 = sphi 0, %s102
      %s120 = sphi 0, %s120
      %s122 = sphi 0, %s120
      %s123 = sphi 0, %s122
      %s137 = sphi 0, %s123
      %s141 = sphi 0, %s141
      %s143 = sphi 0, %s141
      %s144 = sphi 0, %s143
      %s158 = sphi 0, %s144
      %s162 = sphi 0, %s162
      %s164 = sphi 0, %s162
      %s165 = sphi 0, %s164
      %s179 = sphi 0, %s165
      %s183 = sphi 0, %s183
      %s185 = sphi 0, %s183
      %s186 = sphi 0, %s185
      %s200 = sphi 0, %s186
      %s204 = sphi 0, %s204
      %s206 = sphi 0, %s204
      %s207 = sphi 0, %s206
      %s221 = sphi 0, %s207
      %s227 = sphi 0, %s229
      %s230 = sphi 0, %s227
      %s231 = sphi 0, %s230
      %s247 = sphi 0, %s231
    $region4: #{tpu_custom_call.1} parent=1 // loop_header_branch
      %26 = sbr.rel (%p24) target = $region8
    $region5: #{tpu_custom_call.1} parent=1 // loop_body
      %s28 = ssub.s32 %s23, 1
      %s29 = ssub.s32 %s23, 2
      %s30 = sadd.s32 %s23, 1
      %s31 = ssub.s32 %s23, %s30
      %p32 = scmp.eq.s32.totalorder %s31, 0
      %s34 = sadd.s32 %s33, 1
      %s35 = scalar_select %p32, %s33, %s34
      %p38 = pneg %p32
      %p39 = scmp.eq.s32.totalorder %s23, 1
      %p40 = por %p38, %p39
      %p41 = scmp.ne.s32.totalorder %s33, %s36
      %p42 = scmp.eq.s32.totalorder %s23, 0
      %p43 = por %p41, %p42
      %p44 = scmp.ne.s32.totalorder %s33, %s36
      %p45 = scmp.eq.s32.totalorder %s28, 1
      %p46 = por %p44, %p45
      %p47 = scmp.ne.s32.totalorder %s36, %s37
      %p48 = scmp.eq.s32.totalorder %s28, 0
      %p49 = por %p47, %p48
      %p50 = scmp.ne.s32.totalorder %s36, %s37
      %p51 = scmp.eq.s32.totalorder %s29, 1
      %p52 = por %p50, %p51
      %p54 = scmp.ne.s32.totalorder %s37, %s53
      %p55 = scmp.eq.s32.totalorder %s29, 0
      %p56 = por %p54, %p55
      %s58 = sadd.s32 %s57, 1
      %p61 = scmp.eq.s32.totalorder %s23, 1
      %p62 = scmp.ne.s32.totalorder %s57, %s59
      %p63 = scmp.eq.s32.totalorder %s23, 0
      %p64 = por %p62, %p63
      %p65 = scmp.ne.s32.totalorder %s57, %s59
      %p66 = scmp.eq.s32.totalorder %s28, 1
      %p67 = por %p65, %p66
      %p68 = scmp.ne.s32.totalorder %s59, %s60
      %p69 = scmp.eq.s32.totalorder %s28, 0
      %p70 = por %p68, %p69
      %p71 = scmp.ne.s32.totalorder %s59, %s60
      %p72 = scmp.eq.s32.totalorder %s29, 1
      %p73 = por %p71, %p72
      %p75 = scmp.ne.s32.totalorder %s60, %s74
      %p76 = scmp.eq.s32.totalorder %s29, 0
      %p77 = por %p75, %p76
      %s79 = sadd.s32 %s78, 1
      %p82 = scmp.eq.s32.totalorder %s23, 1
      %p83 = scmp.ne.s32.totalorder %s78, %s80
      %p84 = scmp.eq.s32.totalorder %s23, 0
      %p85 = por %p83, %p84
      %p86 = scmp.ne.s32.totalorder %s78, %s80
      %p87 = scmp.eq.s32.totalorder %s28, 1
      %p88 = por %p86, %p87
      %p89 = scmp.ne.s32.totalorder %s80, %s81
      %p90 = scmp.eq.s32.totalorder %s28, 0
      %p91 = por %p89, %p90
      %p92 = scmp.ne.s32.totalorder %s80, %s81
      %p93 = scmp.eq.s32.totalorder %s29, 1
      %p94 = por %p92, %p93
      %p96 = scmp.ne.s32.totalorder %s81, %s95
      %p97 = scmp.eq.s32.totalorder %s29, 0
      %p98 = por %p96, %p97
      %s100 = sadd.s32 %s99, 1
      %p103 = scmp.eq.s32.totalorder %s23, 1
      %p104 = scmp.ne.s32.totalorder %s99, %s101
      %p105 = scmp.eq.s32.totalorder %s23, 0
      %p106 = por %p104, %p105
      %p107 = scmp.ne.s32.totalorder %s99, %s101
      %p108 = scmp.eq.s32.totalorder %s28, 1
      %p109 = por %p107, %p108
      %p110 = scmp.ne.s32.totalorder %s101, %s102
      %p111 = scmp.eq.s32.totalorder %s28, 0
      %p112 = por %p110, %p111
      %p113 = scmp.ne.s32.totalorder %s101, %s102
      %p114 = scmp.eq.s32.totalorder %s29, 1
      %p115 = por %p113, %p114
      %p117 = scmp.ne.s32.totalorder %s102, %s116
      %p118 = scmp.eq.s32.totalorder %s29, 0
      %p119 = por %p117, %p118
      %s121 = sadd.s32 %s120, 1
      %p124 = scmp.eq.s32.totalorder %s23, 1
      %p125 = scmp.ne.s32.totalorder %s120, %s122
      %p126 = scmp.eq.s32.totalorder %s23, 0
      %p127 = por %p125, %p126
      %p128 = scmp.ne.s32.totalorder %s120, %s122
      %p129 = scmp.eq.s32.totalorder %s28, 1
      %p130 = por %p128, %p129
      %p131 = scmp.ne.s32.totalorder %s122, %s123
      %p132 = scmp.eq.s32.totalorder %s28, 0
      %p133 = por %p131, %p132
      %p134 = scmp.ne.s32.totalorder %s122, %s123
      %p135 = scmp.eq.s32.totalorder %s29, 1
      %p136 = por %p134, %p135
      %p138 = scmp.ne.s32.totalorder %s123, %s137
      %p139 = scmp.eq.s32.totalorder %s29, 0
      %p140 = por %p138, %p139
      %s142 = sadd.s32 %s141, 1
      %p145 = scmp.eq.s32.totalorder %s23, 1
      %p146 = scmp.ne.s32.totalorder %s141, %s143
      %p147 = scmp.eq.s32.totalorder %s23, 0
      %p148 = por %p146, %p147
      %p149 = scmp.ne.s32.totalorder %s141, %s143
      %p150 = scmp.eq.s32.totalorder %s28, 1
      %p151 = por %p149, %p150
      %p152 = scmp.ne.s32.totalorder %s143, %s144
      %p153 = scmp.eq.s32.totalorder %s28, 0
      %p154 = por %p152, %p153
      %p155 = scmp.ne.s32.totalorder %s143, %s144
      %p156 = scmp.eq.s32.totalorder %s29, 1
      %p157 = por %p155, %p156
      %p159 = scmp.ne.s32.totalorder %s144, %s158
      %p160 = scmp.eq.s32.totalorder %s29, 0
      %p161 = por %p159, %p160
      %s163 = sadd.s32 %s162, 1
      %p166 = scmp.eq.s32.totalorder %s23, 1
      %p167 = scmp.ne.s32.totalorder %s162, %s164
      %p168 = scmp.eq.s32.totalorder %s23, 0
      %p169 = por %p167, %p168
      %p170 = scmp.ne.s32.totalorder %s162, %s164
      %p171 = scmp.eq.s32.totalorder %s28, 1
      %p172 = por %p170, %p171
      %p173 = scmp.ne.s32.totalorder %s164, %s165
      %p174 = scmp.eq.s32.totalorder %s28, 0
      %p175 = por %p173, %p174
      %p176 = scmp.ne.s32.totalorder %s164, %s165
      %p177 = scmp.eq.s32.totalorder %s29, 1
      %p178 = por %p176, %p177
      %p180 = scmp.ne.s32.totalorder %s165, %s179
      %p181 = scmp.eq.s32.totalorder %s29, 0
      %p182 = por %p180, %p181
      %s184 = sadd.s32 %s183, 1
      %p187 = scmp.eq.s32.totalorder %s23, 1
      %p188 = scmp.ne.s32.totalorder %s183, %s185
      %p189 = scmp.eq.s32.totalorder %s23, 0
      %p190 = por %p188, %p189
      %p191 = scmp.ne.s32.totalorder %s183, %s185
      %p192 = scmp.eq.s32.totalorder %s28, 1
      %p193 = por %p191, %p192
      %p194 = scmp.ne.s32.totalorder %s185, %s186
      %p195 = scmp.eq.s32.totalorder %s28, 0
      %p196 = por %p194, %p195
      %p197 = scmp.ne.s32.totalorder %s185, %s186
      %p198 = scmp.eq.s32.totalorder %s29, 1
      %p199 = por %p197, %p198
      %p201 = scmp.ne.s32.totalorder %s186, %s200
      %p202 = scmp.eq.s32.totalorder %s29, 0
      %p203 = por %p201, %p202
      %s205 = sadd.s32 %s204, 1
      %p208 = scmp.eq.s32.totalorder %s23, 1
      %p209 = scmp.ne.s32.totalorder %s204, %s206
      %p210 = scmp.eq.s32.totalorder %s23, 0
      %p211 = por %p209, %p210
      %p212 = scmp.ne.s32.totalorder %s204, %s206
      %p213 = scmp.eq.s32.totalorder %s28, 1
      %p214 = por %p212, %p213
      %p215 = scmp.ne.s32.totalorder %s206, %s207
      %p216 = scmp.eq.s32.totalorder %s28, 0
      %p217 = por %p215, %p216
      %p218 = scmp.ne.s32.totalorder %s206, %s207
      %p219 = scmp.eq.s32.totalorder %s29, 1
      %p220 = por %p218, %p219
      %p222 = scmp.ne.s32.totalorder %s207, %s221
      %p223 = scmp.eq.s32.totalorder %s29, 0
      %p224 = por %p222, %p223
      %s225 = ssub.s32 %s23, %s30
      %p226 = scmp.eq.s32.totalorder %s225, 0
      %s228 = sadd.s32 %s227, 1
      %s229 = scalar_select %p226, %s227, %s228
      %p232 = pneg %p226
      %p233 = scmp.eq.s32.totalorder %s23, 1
      %p234 = por %p232, %p233
      %p235 = scmp.ne.s32.totalorder %s227, %s230
      %p236 = scmp.eq.s32.totalorder %s23, 0
      %p237 = por %p235, %p236
      %p238 = scmp.ne.s32.totalorder %s227, %s230
      %p239 = scmp.eq.s32.totalorder %s28, 1
      %p240 = por %p238, %p239
      %p241 = scmp.ne.s32.totalorder %s230, %s231
      %p242 = scmp.eq.s32.totalorder %s28, 0
      %p243 = por %p241, %p242
      %p244 = scmp.ne.s32.totalorder %s230, %s231
      %p245 = scmp.eq.s32.totalorder %s29, 1
      %p246 = por %p244, %p245
      %p248 = scmp.ne.s32.totalorder %s231, %s247
      %p249 = scmp.eq.s32.totalorder %s29, 0
      %p250 = por %p248, %p249
      %p251 = scmp.le.s32.totalorder 1, %s23
      %p252 = scmp.lt.s32.totalorder %s23, 3
      %p253 = pnand %p251, %p252
      %p254 = pneg %p253
      // Predicated region
      $region9: #{tpu_custom_call.1} parent=5 // pred_check
        _
      $region10: #{tpu_custom_call.1} parent=5 // pred_check_branch
        %256 = sbr.rel (%p253) target = $region12
      $region11: #{tpu_custom_call.1} parent=5 // pred_region
        %s257 = ssub.s32 %s23, 1
        // Predicated region
        $region13: #{tpu_custom_call.1} parent=11 // pred_check
          %p258 = pneg %p70
        $region14: #{tpu_custom_call.1} parent=11 // pred_check_branch
          %260 = sbr.rel (%p258) target = $region16
        $region15: #{tpu_custom_call.1} parent=11 // pred_region
          %s262 = ssub.s32 3072, 3072
          %263 = vsyncadd [#allocation6], %s262
          %s264 = sshll.u32 [#allocation5], 4
          %s265 = int_to_ptr.vmem [resolvable:$true] %s264
          %270 = dma.hbm_to_vmem [thread:$0]  %s1, 3072, %s265, [#allocation6], 64, 64, 4
        $region16: #{tpu_custom_call.1} parent=11 // pred_fallthru
          _
        // Predicated region
        $region17: #{tpu_custom_call.1} parent=11 // pred_check
          %p271 = pneg %p91
        $region18: #{tpu_custom_call.1} parent=11 // pred_check_branch
          %273 = sbr.rel (%p271) target = $region20
        $region19: #{tpu_custom_call.1} parent=11 // pred_region
          _
        $region20: #{tpu_custom_call.1} parent=11 // pred_fallthru
          _
        // Predicated region
        $region21: #{tpu_custom_call.1} parent=11 // pred_check
          %p274 = pneg %p112
        $region22: #{tpu_custom_call.1} parent=11 // pred_check_branch
          %276 = sbr.rel (%p274) target = $region24
        $region23: #{tpu_custom_call.1} parent=11 // pred_region
          %s278 = ssub.s32 1024, 1024
          %279 = vsyncadd [#allocation6], %s278
          %s280 = sshll.u32 [#allocation7], 4
          %s281 = int_to_ptr.vmem [resolvable:$true] %s280
          %286 = dma.hbm_to_vmem [thread:$0]  %s3, 1024, %s281, [#allocation6], 64, 64, 4
        $region24: #{tpu_custom_call.1} parent=11 // pred_fallthru
          _
        // Predicated region
        $region25: #{tpu_custom_call.1} parent=11 // pred_check
          %p287 = pneg %p133
        $region26: #{tpu_custom_call.1} parent=11 // pred_check_branch
          %289 = sbr.rel (%p287) target = $region28
        $region27: #{tpu_custom_call.1} parent=11 // pred_region
          _
        $region28: #{tpu_custom_call.1} parent=11 // pred_fallthru
          _
        // Predicated region
        $region29: #{tpu_custom_call.1} parent=11 // pred_check
          %p290 = pneg %p154
        $region30: #{tpu_custom_call.1} parent=11 // pred_check_branch
          %292 = sbr.rel (%p290) target = $region32
        $region31: #{tpu_custom_call.1} parent=11 // pred_region
          %s294 = ssub.s32 1024, 1024
          %295 = vsyncadd [#allocation9], %s294
          %s296 = sshll.u32 [#allocation8], 4
          %s297 = int_to_ptr.vmem [resolvable:$true] %s296
          %302 = dma.hbm_to_vmem [thread:$0]  %s5, 1024, %s297, [#allocation9], 64, 64, 4
        $region32: #{tpu_custom_call.1} parent=11 // pred_fallthru
          _
        // Predicated region
        $region33: #{tpu_custom_call.1} parent=11 // pred_check
          %p303 = pneg %p175
        $region34: #{tpu_custom_call.1} parent=11 // pred_check_branch
          %305 = sbr.rel (%p303) target = $region36
        $region35: #{tpu_custom_call.1} parent=11 // pred_region
          _
        $region36: #{tpu_custom_call.1} parent=11 // pred_fallthru
          _
        // Predicated region
        $region37: #{tpu_custom_call.1} parent=11 // pred_check
          %p306 = pneg %p196
        $region38: #{tpu_custom_call.1} parent=11 // pred_check_branch
          %308 = sbr.rel (%p306) target = $region40
        $region39: #{tpu_custom_call.1} parent=11 // pred_region
          %s310 = ssub.s32 1024, 1024
          %311 = vsyncadd [#allocation9], %s310
          %s312 = sshll.u32 [#allocation10], 4
          %s313 = int_to_ptr.vmem [resolvable:$true] %s312
          %318 = dma.hbm_to_vmem [thread:$0]  %s7, 1024, %s313, [#allocation9], 64, 64, 4
        $region40: #{tpu_custom_call.1} parent=11 // pred_fallthru
          _
        // Predicated region
        $region41: #{tpu_custom_call.1} parent=11 // pred_check
          %p319 = pneg %p217
        $region42: #{tpu_custom_call.1} parent=11 // pred_check_branch
          %321 = sbr.rel (%p319) target = $region44
        $region43: #{tpu_custom_call.1} parent=11 // pred_region
          _
        $region44: #{tpu_custom_call.1} parent=11 // pred_fallthru
          _
      $region12: #{tpu_custom_call.1} parent=5 // pred_fallthru
        _
      %p322 = scmp.lt.s32.totalorder %s23, 2
      // Predicated region
      $region45: #{tpu_custom_call.1} parent=5 // pred_check
        %p323 = pneg %p322
      $region46: #{tpu_custom_call.1} parent=5 // pred_check_branch
        %325 = sbr.rel (%p323) target = $region48
      $region47: #{tpu_custom_call.1} parent=5 // pred_region
        // Predicated region
        $region49: #{tpu_custom_call.1} parent=47 // pred_check
          %p326 = pneg %p43
        $region50: #{tpu_custom_call.1} parent=47 // pred_check_branch
          %328 = sbr.rel (%p326) target = $region52
        $region51: #{tpu_custom_call.1} parent=47 // pred_region
          %s329 = sand.u32 %s33, 1
          %s330 = scalar_lea.sflag [#allocation3], %s329
          %s331 = sand.u32 %s33, 1
          %s332 = smul.addr %s331, 144
          %s333 = scalar_lea.vmem [#allocation2], %s332
          %s335 = ssub.s32 2304, 2304
          %336 = vsyncadd %s330, %s335
          %s337 = smul.addr %s23, 36
          %s338 = smul.addr %s337, 64
          %s339 = scalar_lea.hbm %s0, %s338
          %s340 = sshll.u32 %s333, 4
          %s341 = int_to_ptr.vmem [resolvable:$true] %s340
          %346 = dma.hbm_to_vmem [thread:$0]  %s339, 2304, %s341, %s330, 64, 64, 4
        $region52: #{tpu_custom_call.1} parent=47 // pred_fallthru
          _
      $region48: #{tpu_custom_call.1} parent=5 // pred_fallthru
        _
      %p347 = scmp.le.s32.totalorder 1, %s23
      %p348 = scmp.lt.s32.totalorder %s23, 3
      %p349 = pnand %p347, %p348
      %p350 = pneg %p349
      // Predicated region
      $region53: #{tpu_custom_call.1} parent=5 // pred_check
        _
      $region54: #{tpu_custom_call.1} parent=5 // pred_check_branch
        %352 = sbr.rel (%p349) target = $region56
      $region55: #{tpu_custom_call.1} parent=5 // pred_region
        %s353 = ssub.s32 %s23, 1
        %s354 = sand.u32 %s36, 1
        %s355 = scalar_lea.sflag [#allocation3], %s354
        %s356 = sand.u32 %s36, 1
        %s357 = smul.addr %s356, 144
        %s358 = scalar_lea.vmem [#allocation2], %s357
        // Predicated region
        $region57: #{tpu_custom_call.1} parent=55 // pred_check
          %p359 = pneg %p49
        $region58: #{tpu_custom_call.1} parent=55 // pred_check_branch
          %361 = sbr.rel (%p359) target = $region60
        $region59: #{tpu_custom_call.1} parent=55 // pred_region
          %362 = dma.done %s355, 2304
        $region60: #{tpu_custom_call.1} parent=55 // pred_fallthru
          _
        // Predicated region
        $region61: #{tpu_custom_call.1} parent=55 // pred_check
          %p363 = pneg %p70
        $region62: #{tpu_custom_call.1} parent=55 // pred_check_branch
          %365 = sbr.rel (%p363) target = $region64
        $region63: #{tpu_custom_call.1} parent=55 // pred_region
          %366 = dma.done [#allocation6], 3072
        $region64: #{tpu_custom_call.1} parent=55 // pred_fallthru
          _
        // Predicated region
        $region65: #{tpu_custom_call.1} parent=55 // pred_check
          %p367 = pneg %p112
        $region66: #{tpu_custom_call.1} parent=55 // pred_check_branch
          %369 = sbr.rel (%p367) target = $region68
        $region67: #{tpu_custom_call.1} parent=55 // pred_region
          %370 = dma.done [#allocation6], 1024
        $region68: #{tpu_custom_call.1} parent=55 // pred_fallthru
          _
        // Predicated region
        $region69: #{tpu_custom_call.1} parent=55 // pred_check
          %p371 = pneg %p154
        $region70: #{tpu_custom_call.1} parent=55 // pred_check_branch
          %373 = sbr.rel (%p371) target = $region72
        $region71: #{tpu_custom_call.1} parent=55 // pred_region
          %374 = dma.done [#allocation9], 1024
        $region72: #{tpu_custom_call.1} parent=55 // pred_fallthru
          _
        // Predicated region
        $region73: #{tpu_custom_call.1} parent=55 // pred_check
          %p375 = pneg %p196
        $region74: #{tpu_custom_call.1} parent=55 // pred_check_branch
          %377 = sbr.rel (%p375) target = $region76
        $region75: #{tpu_custom_call.1} parent=55 // pred_region
          %378 = dma.done [#allocation9], 1024
        $region76: #{tpu_custom_call.1} parent=55 // pred_fallthru
          _
        %s379 = sand.u32 %s36, 1
        %s380 = scalar_lea.sflag [#allocation3], %s379
        %s381 = sand.u32 %s36, 1
        %s382 = smul.addr %s381, 144
        %s383 = scalar_lea.vmem [#allocation2], %s382
        %p384 = pneg %p49
        %p385 = pneg %p46
        %p386 = pneg %p70
        %p387 = pneg %p67
        %p388 = pneg %p91
        %p389 = pneg %p88
        %p390 = pneg %p112
        %p391 = pneg %p109
        %p392 = pneg %p133
        %p393 = pneg %p130
        %p394 = pneg %p154
        %p395 = pneg %p151
        %p396 = pneg %p175
        %p397 = pneg %p172
        %p398 = pneg %p196
        %p399 = pneg %p193
        %p400 = pneg %p217
        %p401 = pneg %p214
        %p402 = pneg %p243
        %p403 = pneg %p240
        %s404 = sand.u32 %s230, 1
        %s405 = scalar_lea.sflag [#allocation4], %s404
        %s406 = sand.u32 %s230, 1
        %s407 = smul.addr %s406, 256
        %s408 = scalar_lea.vmem [#allocation11], %s407
        %v410 = vld [vmem:[%s358] sm:$0xf]
        %v411 = vld [vmem:[%s358 + $0x4] sm:$0xf]
        %v412 = vld [vmem:[%s358 + $0x8] sm:$0xf]
        %v413 = vld [vmem:[%s358 + $0xc] sm:$0xf]
        %v414 = vld [vmem:[%s358 + $0x10] sm:$0xf]
        %v415 = vld [vmem:[%s358 + $0x14] sm:$0xf]
        %v416 = vld [vmem:[%s358 + $0x18] sm:$0xf]
        %v417 = vld [vmem:[%s358 + $0x1c] sm:$0xf]
        %v418 = vld [vmem:[%s358 + $0x20] sm:$0xf]
        %v419 = vld [vmem:[%s358 + $0x24] sm:$0xf]
        %v420 = vld [vmem:[%s358 + $0x28] sm:$0xf]
        %v421 = vld [vmem:[%s358 + $0x2c] sm:$0xf]
        %v422 = vld [vmem:[%s358 + $0x30] sm:$0xf]
        %v423 = vld [vmem:[%s358 + $0x34] sm:$0xf]
        %v424 = vld [vmem:[%s358 + $0x38] sm:$0xf]
        %v425 = vld [vmem:[%s358 + $0x3c] sm:$0xf]
        %v426 = vld [vmem:[%s358 + $0x40] sm:$0xf]
        %v427 = vld [vmem:[%s358 + $0x44] sm:$0xf]
        %v428 = vld [vmem:[%s358 + $0x48] sm:$0xf]
        %v429 = vld [vmem:[%s358 + $0x4c] sm:$0xf]
        %v430 = vld [vmem:[%s358 + $0x50] sm:$0xf]
        %v431 = vld [vmem:[%s358 + $0x54] sm:$0xf]
        %v432 = vld [vmem:[%s358 + $0x58] sm:$0xf]
        %v433 = vld [vmem:[%s358 + $0x5c] sm:$0xf]
        %v434 = vld [vmem:[%s358 + $0x60] sm:$0xf]
        %v435 = vld [vmem:[%s358 + $0x64] sm:$0xf]
        %v436 = vld [vmem:[%s358 + $0x68] sm:$0xf]
        %v437 = vld [vmem:[%s358 + $0x6c] sm:$0xf]
        %v438 = vld [vmem:[%s358 + $0x70] sm:$0xf]
        %v439 = vld [vmem:[%s358 + $0x74] sm:$0xf]
        %v440 = vld [vmem:[%s358 + $0x78] sm:$0xf]
        %v441 = vld [vmem:[%s358 + $0x7c] sm:$0xf]
        %v442 = vld [vmem:[%s358 + $0x80] sm:$0xf]
        %v443 = vld [vmem:[%s358 + $0x84] sm:$0xf]
        %v444 = vld [vmem:[%s358 + $0x88] sm:$0xf]
        %v445 = vld [vmem:[%s358 + $0x8c] sm:$0xf]
        %v446 = vld [vmem:[#allocation5] sm:$0xf]
        %v447 = vld [vmem:[#allocation5 + $0x4] sm:$0xf]
        %v448 = vld [vmem:[#allocation5 + $0x8] sm:$0xf]
        %v449 = vld [vmem:[#allocation5 + $0xc] sm:$0xf]
        %v450 = vld [vmem:[#allocation5 + $0x10] sm:$0xf]
        %v451 = vld [vmem:[#allocation5 + $0x14] sm:$0xf]
        %v452 = vld [vmem:[#allocation5 + $0x18] sm:$0xf]
        %v453 = vld [vmem:[#allocation5 + $0x1c] sm:$0xf]
        %v454 = vld [vmem:[#allocation5 + $0x20] sm:$0xf]
        %v455 = vld [vmem:[#allocation5 + $0x24] sm:$0xf]
        %v456 = vld [vmem:[#allocation5 + $0x28] sm:$0xf]
        %v457 = vld [vmem:[#allocation5 + $0x2c] sm:$0xf]
        %v458 = vld [vmem:[#allocation5 + $0x30] sm:$0xf]
        %v459 = vld [vmem:[#allocation5 + $0x34] sm:$0xf]
        %v460 = vld [vmem:[#allocation5 + $0x38] sm:$0xf]
        %v461 = vld [vmem:[#allocation5 + $0x3c] sm:$0xf]
        %s462 = scalar_lea.vmem [#allocation5], 64
        %v463 = vld [vmem:[%s462] sm:$0xf]
        %v464 = vld [vmem:[%s462 + $0x4] sm:$0xf]
        %v465 = vld [vmem:[%s462 + $0x8] sm:$0xf]
        %v466 = vld [vmem:[%s462 + $0xc] sm:$0xf]
        %v467 = vld [vmem:[%s462 + $0x10] sm:$0xf]
        %v468 = vld [vmem:[%s462 + $0x14] sm:$0xf]
        %v469 = vld [vmem:[%s462 + $0x18] sm:$0xf]
        %v470 = vld [vmem:[%s462 + $0x1c] sm:$0xf]
        %v471 = vld [vmem:[%s462 + $0x20] sm:$0xf]
        %v472 = vld [vmem:[%s462 + $0x24] sm:$0xf]
        %v473 = vld [vmem:[%s462 + $0x28] sm:$0xf]
        %v474 = vld [vmem:[%s462 + $0x2c] sm:$0xf]
        %v475 = vld [vmem:[%s462 + $0x30] sm:$0xf]
        %v476 = vld [vmem:[%s462 + $0x34] sm:$0xf]
        %v477 = vld [vmem:[%s462 + $0x38] sm:$0xf]
        %v478 = vld [vmem:[%s462 + $0x3c] sm:$0xf]
        %v511 = vunpack.c.l.b16 %v412
        %v512 = vunpack.c.l.b16 %v413
        %v513 = vunpack.c.l.b16 %v414
        %v514 = vunpack.c.l.b16 %v415
        %v515 = vunpack.c.l.b16 %v416
        %v516 = vunpack.c.l.b16 %v417
        %v517 = vunpack.c.l.b16 %v418
        %v518 = vunpack.c.l.b16 %v419
        %v519 = vunpack.c.l.b16 %v420
        %v520 = vunpack.c.l.b16 %v421
        %v521 = vunpack.c.l.b16 %v422
        %v522 = vunpack.c.l.b16 %v423
        %v523 = vunpack.c.l.b16 %v424
        %v524 = vunpack.c.l.b16 %v425
        %v525 = vunpack.c.l.b16 %v426
        %v526 = vunpack.c.l.b16 %v427
        %v527 = vunpack.c.l.b16 %v428
        %v528 = vunpack.c.l.b16 %v429
        %v529 = vunpack.c.l.b16 %v430
        %v530 = vunpack.c.l.b16 %v431
        %v531 = vunpack.c.l.b16 %v432
        %v532 = vunpack.c.l.b16 %v433
        %v533 = vunpack.c.l.b16 %v434
        %v534 = vunpack.c.l.b16 %v435
        %v535 = vunpack.c.l.b16 %v436
        %v536 = vunpack.c.l.b16 %v437
        %v537 = vunpack.c.l.b16 %v438
        %v538 = vunpack.c.l.b16 %v439
        %v539 = vunpack.c.l.b16 %v440
        %v540 = vunpack.c.l.b16 %v441
        %v541 = vunpack.c.l.b16 %v442
        %v542 = vunpack.c.l.b16 %v443
        %v543 = vpack.c.b16 %v512, %v511
        %v544 = vpack.c.b16 %v514, %v513
        %v545 = vpack.c.b16 %v516, %v515
        %v546 = vpack.c.b16 %v518, %v517
        %v547 = vpack.c.b16 %v520, %v519
        %v548 = vpack.c.b16 %v522, %v521
        %v549 = vpack.c.b16 %v524, %v523
        %v550 = vpack.c.b16 %v526, %v525
        %v551 = vpack.c.b16 %v528, %v527
        %v552 = vpack.c.b16 %v530, %v529
        %v553 = vpack.c.b16 %v532, %v531
        %v554 = vpack.c.b16 %v534, %v533
        %v555 = vpack.c.b16 %v536, %v535
        %v556 = vpack.c.b16 %v538, %v537
        %v557 = vpack.c.b16 %v540, %v539
        %v558 = vpack.c.b16 %v542, %v541
        %v591 = vunpack.c.l.b16 %v463
        %v592 = vunpack.c.l.b16 %v464
        %v593 = vunpack.c.l.b16 %v465
        %v594 = vunpack.c.l.b16 %v466
        %v595 = vunpack.c.l.b16 %v467
        %v596 = vunpack.c.l.b16 %v468
        %v597 = vunpack.c.l.b16 %v469
        %v598 = vunpack.c.l.b16 %v470
        %v599 = vunpack.c.l.b16 %v471
        %v600 = vunpack.c.l.b16 %v472
        %v601 = vunpack.c.l.b16 %v473
        %v602 = vunpack.c.l.b16 %v474
        %v603 = vunpack.c.l.b16 %v475
        %v604 = vunpack.c.l.b16 %v476
        %v605 = vunpack.c.l.b16 %v477
        %v606 = vunpack.c.l.b16 %v478
        %v607 = vpack.c.b16 %v592, %v591
        %v608 = vpack.c.b16 %v594, %v593
        %v609 = vpack.c.b16 %v596, %v595
        %v610 = vpack.c.b16 %v598, %v597
        %v611 = vpack.c.b16 %v600, %v599
        %v612 = vpack.c.b16 %v602, %v601
        %v613 = vpack.c.b16 %v604, %v603
        %v614 = vpack.c.b16 %v606, %v605
        %623 = vmatprep.subr.bf16.mxu0 0
        %624 = vmatpush1.bf16.msra.mxu0 %v614
        %625 = vmatprep.subr.bf16.mxu0 0
        %626 = vmatpush1.bf16.msra.mxu0 %v613
        %627 = vmatprep.subr.bf16.mxu0 0
        %628 = vmatpush1.bf16.msra.mxu0 %v612
        %629 = vmatprep.subr.bf16.mxu0 0
        %630 = vmatpush1.bf16.msra.mxu0 %v611
        %631 = vmatprep.subr.bf16.mxu0 0
        %632 = vmatpush1.bf16.msra.mxu0 %v610
        %633 = vmatprep.subr.bf16.mxu0 0
        %634 = vmatpush1.bf16.msra.mxu0 %v609
        %635 = vmatprep.subr.bf16.mxu0 0
        %636 = vmatpush1.bf16.msra.mxu0 %v608
        %637 = vmatprep.subr.bf16.mxu0 0
        %638 = vmatpush1.bf16.msra.mxu0 %v607
        %639 = vmatprep.subr.bf16.mxu0 0
        %640 = vmatpush2.bf16.msra.mxu0 0
        %641 = vmatprep.subr.bf16.mxu0 0
        %642 = vmatpush2.bf16.msra.mxu0 0
        %643 = vmatprep.subr.bf16.mxu0 0
        %644 = vmatpush2.bf16.msra.mxu0 0
        %645 = vmatprep.subr.bf16.mxu0 0
        %646 = vmatpush2.bf16.msra.mxu0 0
        %647 = vmatprep.subr.bf16.mxu0 0
        %648 = vmatpush2.bf16.msra.mxu0 0
        %649 = vmatprep.subr.bf16.mxu0 0
        %650 = vmatpush2.bf16.msra.mxu0 0
        %651 = vmatprep.subr.bf16.mxu0 0
        %652 = vmatpush2.bf16.msra.mxu0 0
        %653 = vmatprep.subr.bf16.mxu0 0
        %654 = vmatpush2.bf16.msra.mxu0 0
        %655 = vmatprep.mubr.bf16.mxu0 0
        %656 = vmatmul.mubr.bf16.gmra.mxu0 %v543
        %v657 = vpop.f32.mrf.mxu0
        %v658 = vadd.f32 0.0, %v657
        %v659 = vpop.f32.mrf.mxu0
        %v660 = vpop.f32.mrf.mxu0
        %v661 = vadd.f32 0.0, %v660
        %v662 = vpop.f32.mrf.mxu0
        %663 = vmatprep.mubr.bf16.mxu0 0
        %664 = vmatmul.mubr.bf16.gmra.mxu0 %v544
        %v665 = vpop.f32.mrf.mxu0
        %v666 = vadd.f32 0.0, %v665
        %v667 = vpop.f32.mrf.mxu0
        %v668 = vpop.f32.mrf.mxu0
        %v669 = vadd.f32 0.0, %v668
        %v670 = vpop.f32.mrf.mxu0
        %671 = vmatprep.mubr.bf16.mxu0 0
        %672 = vmatmul.mubr.bf16.gmra.mxu0 %v545
        %v673 = vpop.f32.mrf.mxu0
        %v674 = vadd.f32 0.0, %v673
        %v675 = vpop.f32.mrf.mxu0
        %v676 = vpop.f32.mrf.mxu0
        %v677 = vadd.f32 0.0, %v676
        %v678 = vpop.f32.mrf.mxu0
        %679 = vmatprep.mubr.bf16.mxu0 0
        %680 = vmatmul.mubr.bf16.gmra.mxu0 %v546
        %v681 = vpop.f32.mrf.mxu0
        %v682 = vadd.f32 0.0, %v681
        %v683 = vpop.f32.mrf.mxu0
        %v684 = vpop.f32.mrf.mxu0
        %v685 = vadd.f32 0.0, %v684
        %v686 = vpop.f32.mrf.mxu0
        %687 = vmatprep.mubr.bf16.mxu0 0
        %688 = vmatmul.mubr.bf16.gmra.mxu0 %v547
        %v689 = vpop.f32.mrf.mxu0
        %v690 = vadd.f32 0.0, %v689
        %v691 = vpop.f32.mrf.mxu0
        %v692 = vpop.f32.mrf.mxu0
        %v693 = vadd.f32 0.0, %v692
        %v694 = vpop.f32.mrf.mxu0
        %695 = vmatprep.mubr.bf16.mxu0 0
        %696 = vmatmul.mubr.bf16.gmra.mxu0 %v548
        %v697 = vpop.f32.mrf.mxu0
        %v698 = vadd.f32 0.0, %v697
        %v699 = vpop.f32.mrf.mxu0
        %v700 = vpop.f32.mrf.mxu0
        %v701 = vadd.f32 0.0, %v700
        %v702 = vpop.f32.mrf.mxu0
        %703 = vmatprep.mubr.bf16.mxu0 0
        %704 = vmatmul.mubr.bf16.gmra.mxu0 %v549
        %v705 = vpop.f32.mrf.mxu0
        %v706 = vadd.f32 0.0, %v705
        %v707 = vpop.f32.mrf.mxu0
        %v708 = vpop.f32.mrf.mxu0
        %v709 = vadd.f32 0.0, %v708
        %v710 = vpop.f32.mrf.mxu0
        %711 = vmatprep.mubr.bf16.mxu0 0
        %712 = vmatmul.mubr.bf16.gmra.mxu0 %v550
        %v713 = vpop.f32.mrf.mxu0
        %v714 = vadd.f32 0.0, %v713
        %v715 = vpop.f32.mrf.mxu0
        %v716 = vpop.f32.mrf.mxu0
        %v717 = vadd.f32 0.0, %v716
        %v718 = vpop.f32.mrf.mxu0
        %719 = vmatprep.mubr.bf16.mxu0 0
        %720 = vmatmul.mubr.bf16.gmra.mxu0 %v551
        %v721 = vpop.f32.mrf.mxu0
        %v722 = vadd.f32 0.0, %v721
        %v723 = vpop.f32.mrf.mxu0
        %v724 = vpop.f32.mrf.mxu0
        %v725 = vadd.f32 0.0, %v724
        %v726 = vpop.f32.mrf.mxu0
        %727 = vmatprep.mubr.bf16.mxu0 0
        %728 = vmatmul.mubr.bf16.gmra.mxu0 %v552
        %v729 = vpop.f32.mrf.mxu0
        %v730 = vadd.f32 0.0, %v729
        %v731 = vpop.f32.mrf.mxu0
        %v732 = vpop.f32.mrf.mxu0
        %v733 = vadd.f32 0.0, %v732
        %v734 = vpop.f32.mrf.mxu0
        %735 = vmatprep.mubr.bf16.mxu0 0
        %736 = vmatmul.mubr.bf16.gmra.mxu0 %v553
        %v737 = vpop.f32.mrf.mxu0
        %v738 = vadd.f32 0.0, %v737
        %v739 = vpop.f32.mrf.mxu0
        %v740 = vpop.f32.mrf.mxu0
        %v741 = vadd.f32 0.0, %v740
        %v742 = vpop.f32.mrf.mxu0
        %743 = vmatprep.mubr.bf16.mxu0 0
        %744 = vmatmul.mubr.bf16.gmra.mxu0 %v554
        %v745 = vpop.f32.mrf.mxu0
        %v746 = vadd.f32 0.0, %v745
        %v747 = vpop.f32.mrf.mxu0
        %v748 = vpop.f32.mrf.mxu0
        %v749 = vadd.f32 0.0, %v748
        %v750 = vpop.f32.mrf.mxu0
        %751 = vmatprep.mubr.bf16.mxu0 0
        %752 = vmatmul.mubr.bf16.gmra.mxu0 %v555
        %v753 = vpop.f32.mrf.mxu0
        %v754 = vadd.f32 0.0, %v753
        %v755 = vpop.f32.mrf.mxu0
        %v756 = vpop.f32.mrf.mxu0
        %v757 = vadd.f32 0.0, %v756
        %v758 = vpop.f32.mrf.mxu0
        %759 = vmatprep.mubr.bf16.mxu0 0
        %760 = vmatmul.mubr.bf16.gmra.mxu0 %v556
        %v761 = vpop.f32.mrf.mxu0
        %v762 = vadd.f32 0.0, %v761
        %v763 = vpop.f32.mrf.mxu0
        %v764 = vpop.f32.mrf.mxu0
        %v765 = vadd.f32 0.0, %v764
        %v766 = vpop.f32.mrf.mxu0
        %767 = vmatprep.mubr.bf16.mxu0 0
        %768 = vmatmul.mubr.bf16.gmra.mxu0 %v557
        %v769 = vpop.f32.mrf.mxu0
        %v770 = vadd.f32 0.0, %v769
        %v771 = vpop.f32.mrf.mxu0
        %v772 = vpop.f32.mrf.mxu0
        %v773 = vadd.f32 0.0, %v772
        %v774 = vpop.f32.mrf.mxu0
        %775 = vmatprep.mubr.bf16.mxu0 0
        %776 = vmatmul.mubr.bf16.gmra.mxu0 %v558
        %v777 = vpop.f32.mrf.mxu0
        %v778 = vadd.f32 0.0, %v777
        %v779 = vpop.f32.mrf.mxu0
        %v780 = vpop.f32.mrf.mxu0
        %v781 = vadd.f32 0.0, %v780
        %v782 = vpop.f32.mrf.mxu0
        %783 = vdwg.mxu0
        %v786 = vunpack.c.l.b16 %v410
        %v787 = vunpack.c.l.b16 %v411
        %v788 = vpack.c.b16 %v787, %v786
        %v806 = vunpack.c.l.b16 %v446
        %v807 = vunpack.c.l.b16 %v447
        %v808 = vunpack.c.l.b16 %v448
        %v809 = vunpack.c.l.b16 %v449
        %v810 = vunpack.c.l.b16 %v450
        %v811 = vunpack.c.l.b16 %v451
        %v812 = vunpack.c.l.b16 %v452
        %v813 = vunpack.c.l.b16 %v453
        %v814 = vunpack.c.l.b16 %v454
        %v815 = vunpack.c.l.b16 %v455
        %v816 = vunpack.c.l.b16 %v456
        %v817 = vunpack.c.l.b16 %v457
        %v818 = vunpack.c.l.b16 %v458
        %v819 = vunpack.c.l.b16 %v459
        %v820 = vunpack.c.l.b16 %v460
        %v821 = vunpack.c.l.b16 %v461
        %v822 = vpack.c.b16 %v807, %v806
        %v823 = vpack.c.b16 %v809, %v808
        %v824 = vpack.c.b16 %v811, %v810
        %v825 = vpack.c.b16 %v813, %v812
        %v826 = vpack.c.b16 %v815, %v814
        %v827 = vpack.c.b16 %v817, %v816
        %v828 = vpack.c.b16 %v819, %v818
        %v829 = vpack.c.b16 %v821, %v820
        %838 = vmatprep.subr.bf16.mxu0 0
        %839 = vmatpush1.bf16.msra.mxu0 %v829
        %840 = vmatprep.subr.bf16.mxu0 0
        %841 = vmatpush1.bf16.msra.mxu0 %v828
        %842 = vmatprep.subr.bf16.mxu0 0
        %843 = vmatpush1.bf16.msra.mxu0 %v827
        %844 = vmatprep.subr.bf16.mxu0 0
        %845 = vmatpush1.bf16.msra.mxu0 %v826
        %846 = vmatprep.subr.bf16.mxu0 0
        %847 = vmatpush1.bf16.msra.mxu0 %v825
        %848 = vmatprep.subr.bf16.mxu0 0
        %849 = vmatpush1.bf16.msra.mxu0 %v824
        %850 = vmatprep.subr.bf16.mxu0 0
        %851 = vmatpush1.bf16.msra.mxu0 %v823
        %852 = vmatprep.subr.bf16.mxu0 0
        %853 = vmatpush1.bf16.msra.mxu0 %v822
        %854 = vmatprep.subr.bf16.mxu0 0
        %855 = vmatpush2.bf16.msra.mxu0 0
        %856 = vmatprep.subr.bf16.mxu0 0
        %857 = vmatpush2.bf16.msra.mxu0 0
        %858 = vmatprep.subr.bf16.mxu0 0
        %859 = vmatpush2.bf16.msra.mxu0 0
        %860 = vmatprep.subr.bf16.mxu0 0
        %861 = vmatpush2.bf16.msra.mxu0 0
        %862 = vmatprep.subr.bf16.mxu0 0
        %863 = vmatpush2.bf16.msra.mxu0 0
        %864 = vmatprep.subr.bf16.mxu0 0
        %865 = vmatpush2.bf16.msra.mxu0 0
        %866 = vmatprep.subr.bf16.mxu0 0
        %867 = vmatpush2.bf16.msra.mxu0 0
        %868 = vmatprep.subr.bf16.mxu0 0
        %869 = vmatpush2.bf16.msra.mxu0 0
        %870 = vmatprep.mubr.bf16.mxu0 0
        %871 = vmatmul.mubr.bf16.gmra.mxu0 %v788
        %v872 = vpop.f32.mrf.mxu0
        %v873 = vadd.f32 %v658, %v872
        %v874 = vpop.f32.mrf.mxu0
        %v875 = vpop.f32.mrf.mxu0
        %v876 = vadd.f32 %v661, %v875
        %v877 = vpop.f32.mrf.mxu0
        %878 = vmatprep.mubr.bf16.mxu0 0
        %879 = vmatmul.mubr.bf16.gmra.mxu0 %v543
        %v880 = vpop.f32.mrf.mxu0
        %v881 = vadd.f32 %v666, %v880
        %v882 = vpop.f32.mrf.mxu0
        %v883 = vpop.f32.mrf.mxu0
        %v884 = vadd.f32 %v669, %v883
        %v885 = vpop.f32.mrf.mxu0
        %886 = vmatprep.mubr.bf16.mxu0 0
        %887 = vmatmul.mubr.bf16.gmra.mxu0 %v544
        %v888 = vpop.f32.mrf.mxu0
        %v889 = vadd.f32 %v674, %v888
        %v890 = vpop.f32.mrf.mxu0
        %v891 = vpop.f32.mrf.mxu0
        %v892 = vadd.f32 %v677, %v891
        %v893 = vpop.f32.mrf.mxu0
        %894 = vmatprep.mubr.bf16.mxu0 0
        %895 = vmatmul.mubr.bf16.gmra.mxu0 %v545
        %v896 = vpop.f32.mrf.mxu0
        %v897 = vadd.f32 %v682, %v896
        %v898 = vpop.f32.mrf.mxu0
        %v899 = vpop.f32.mrf.mxu0
        %v900 = vadd.f32 %v685, %v899
        %v901 = vpop.f32.mrf.mxu0
        %902 = vmatprep.mubr.bf16.mxu0 0
        %903 = vmatmul.mubr.bf16.gmra.mxu0 %v546
        %v904 = vpop.f32.mrf.mxu0
        %v905 = vadd.f32 %v690, %v904
        %v906 = vpop.f32.mrf.mxu0
        %v907 = vpop.f32.mrf.mxu0
        %v908 = vadd.f32 %v693, %v907
        %v909 = vpop.f32.mrf.mxu0
        %910 = vmatprep.mubr.bf16.mxu0 0
        %911 = vmatmul.mubr.bf16.gmra.mxu0 %v547
        %v912 = vpop.f32.mrf.mxu0
        %v913 = vadd.f32 %v698, %v912
        %v914 = vpop.f32.mrf.mxu0
        %v915 = vpop.f32.mrf.mxu0
        %v916 = vadd.f32 %v701, %v915
        %v917 = vpop.f32.mrf.mxu0
        %918 = vmatprep.mubr.bf16.mxu0 0
        %919 = vmatmul.mubr.bf16.gmra.mxu0 %v548
        %v920 = vpop.f32.mrf.mxu0
        %v921 = vadd.f32 %v706, %v920
        %v922 = vpop.f32.mrf.mxu0
        %v923 = vpop.f32.mrf.mxu0
        %v924 = vadd.f32 %v709, %v923
        %v925 = vpop.f32.mrf.mxu0
        %926 = vmatprep.mubr.bf16.mxu0 0
        %927 = vmatmul.mubr.bf16.gmra.mxu0 %v549
        %v928 = vpop.f32.mrf.mxu0
        %v929 = vadd.f32 %v714, %v928
        %v930 = vpop.f32.mrf.mxu0
        %v931 = vpop.f32.mrf.mxu0
        %v932 = vadd.f32 %v717, %v931
        %v933 = vpop.f32.mrf.mxu0
        %934 = vmatprep.mubr.bf16.mxu0 0
        %935 = vmatmul.mubr.bf16.gmra.mxu0 %v550
        %v936 = vpop.f32.mrf.mxu0
        %v937 = vadd.f32 %v722, %v936
        %v938 = vpop.f32.mrf.mxu0
        %v939 = vpop.f32.mrf.mxu0
        %v940 = vadd.f32 %v725, %v939
        %v941 = vpop.f32.mrf.mxu0
        %942 = vmatprep.mubr.bf16.mxu0 0
        %943 = vmatmul.mubr.bf16.gmra.mxu0 %v551
        %v944 = vpop.f32.mrf.mxu0
        %v945 = vadd.f32 %v730, %v944
        %v946 = vpop.f32.mrf.mxu0
        %v947 = vpop.f32.mrf.mxu0
        %v948 = vadd.f32 %v733, %v947
        %v949 = vpop.f32.mrf.mxu0
        %950 = vmatprep.mubr.bf16.mxu0 0
        %951 = vmatmul.mubr.bf16.gmra.mxu0 %v552
        %v952 = vpop.f32.mrf.mxu0
        %v953 = vadd.f32 %v738, %v952
        %v954 = vpop.f32.mrf.mxu0
        %v955 = vpop.f32.mrf.mxu0
        %v956 = vadd.f32 %v741, %v955
        %v957 = vpop.f32.mrf.mxu0
        %958 = vmatprep.mubr.bf16.mxu0 0
        %959 = vmatmul.mubr.bf16.gmra.mxu0 %v553
        %v960 = vpop.f32.mrf.mxu0
        %v961 = vadd.f32 %v746, %v960
        %v962 = vpop.f32.mrf.mxu0
        %v963 = vpop.f32.mrf.mxu0
        %v964 = vadd.f32 %v749, %v963
        %v965 = vpop.f32.mrf.mxu0
        %966 = vmatprep.mubr.bf16.mxu0 0
        %967 = vmatmul.mubr.bf16.gmra.mxu0 %v554
        %v968 = vpop.f32.mrf.mxu0
        %v969 = vadd.f32 %v754, %v968
        %v970 = vpop.f32.mrf.mxu0
        %v971 = vpop.f32.mrf.mxu0
        %v972 = vadd.f32 %v757, %v971
        %v973 = vpop.f32.mrf.mxu0
        %974 = vmatprep.mubr.bf16.mxu0 0
        %975 = vmatmul.mubr.bf16.gmra.mxu0 %v555
        %v976 = vpop.f32.mrf.mxu0
        %v977 = vadd.f32 %v762, %v976
        %v978 = vpop.f32.mrf.mxu0
        %v979 = vpop.f32.mrf.mxu0
        %v980 = vadd.f32 %v765, %v979
        %v981 = vpop.f32.mrf.mxu0
        %982 = vmatprep.mubr.bf16.mxu0 0
        %983 = vmatmul.mubr.bf16.gmra.mxu0 %v556
        %v984 = vpop.f32.mrf.mxu0
        %v985 = vadd.f32 %v770, %v984
        %v986 = vpop.f32.mrf.mxu0
        %v987 = vpop.f32.mrf.mxu0
        %v988 = vadd.f32 %v773, %v987
        %v989 = vpop.f32.mrf.mxu0
        %990 = vmatprep.mubr.bf16.mxu0 0
        %991 = vmatmul.mubr.bf16.gmra.mxu0 %v557
        %v992 = vpop.f32.mrf.mxu0
        %v993 = vadd.f32 %v778, %v992
        %v994 = vpop.f32.mrf.mxu0
        %v995 = vpop.f32.mrf.mxu0
        %v996 = vadd.f32 %v781, %v995
        %v997 = vpop.f32.mrf.mxu0
        %998 = vdwg.mxu0
        %s999 = scalar_lea.vmem [#allocation5], 128
        %v1000 = vld [vmem:[%s999] sm:$0xf]
        %v1001 = vld [vmem:[%s999 + $0x4] sm:$0xf]
        %v1002 = vld [vmem:[%s999 + $0x8] sm:$0xf]
        %v1003 = vld [vmem:[%s999 + $0xc] sm:$0xf]
        %v1004 = vld [vmem:[%s999 + $0x10] sm:$0xf]
        %v1005 = vld [vmem:[%s999 + $0x14] sm:$0xf]
        %v1006 = vld [vmem:[%s999 + $0x18] sm:$0xf]
        %v1007 = vld [vmem:[%s999 + $0x1c] sm:$0xf]
        %v1008 = vld [vmem:[%s999 + $0x20] sm:$0xf]
        %v1009 = vld [vmem:[%s999 + $0x24] sm:$0xf]
        %v1010 = vld [vmem:[%s999 + $0x28] sm:$0xf]
        %v1011 = vld [vmem:[%s999 + $0x2c] sm:$0xf]
        %v1012 = vld [vmem:[%s999 + $0x30] sm:$0xf]
        %v1013 = vld [vmem:[%s999 + $0x34] sm:$0xf]
        %v1014 = vld [vmem:[%s999 + $0x38] sm:$0xf]
        %v1015 = vld [vmem:[%s999 + $0x3c] sm:$0xf]
        %v1018 = vunpack.c.l.b16 %v444
        %v1019 = vunpack.c.l.b16 %v445
        %v1020 = vpack.c.b16 %v1019, %v1018
        %v1038 = vunpack.c.l.b16 %v1000
        %v1039 = vunpack.c.l.b16 %v1001
        %v1040 = vunpack.c.l.b16 %v1002
        %v1041 = vunpack.c.l.b16 %v1003
        %v1042 = vunpack.c.l.b16 %v1004
        %v1043 = vunpack.c.l.b16 %v1005
        %v1044 = vunpack.c.l.b16 %v1006
        %v1045 = vunpack.c.l.b16 %v1007
        %v1046 = vunpack.c.l.b16 %v1008
        %v1047 = vunpack.c.l.b16 %v1009
        %v1048 = vunpack.c.l.b16 %v1010
        %v1049 = vunpack.c.l.b16 %v1011
        %v1050 = vunpack.c.l.b16 %v1012
        %v1051 = vunpack.c.l.b16 %v1013
        %v1052 = vunpack.c.l.b16 %v1014
        %v1053 = vunpack.c.l.b16 %v1015
        %v1054 = vpack.c.b16 %v1039, %v1038
        %v1055 = vpack.c.b16 %v1041, %v1040
        %v1056 = vpack.c.b16 %v1043, %v1042
        %v1057 = vpack.c.b16 %v1045, %v1044
        %v1058 = vpack.c.b16 %v1047, %v1046
        %v1059 = vpack.c.b16 %v1049, %v1048
        %v1060 = vpack.c.b16 %v1051, %v1050
        %v1061 = vpack.c.b16 %v1053, %v1052
        %1070 = vmatprep.subr.bf16.mxu0 0
        %1071 = vmatpush1.bf16.msra.mxu0 %v1061
        %1072 = vmatprep.subr.bf16.mxu0 0
        %1073 = vmatpush1.bf16.msra.mxu0 %v1060
        %1074 = vmatprep.subr.bf16.mxu0 0
        %1075 = vmatpush1.bf16.msra.mxu0 %v1059
        %1076 = vmatprep.subr.bf16.mxu0 0
        %1077 = vmatpush1.bf16.msra.mxu0 %v1058
        %1078 = vmatprep.subr.bf16.mxu0 0
        %1079 = vmatpush1.bf16.msra.mxu0 %v1057
        %1080 = vmatprep.subr.bf16.mxu0 0
        %1081 = vmatpush1.bf16.msra.mxu0 %v1056
        %1082 = vmatprep.subr.bf16.mxu0 0
        %1083 = vmatpush1.bf16.msra.mxu0 %v1055
        %1084 = vmatprep.subr.bf16.mxu0 0
        %1085 = vmatpush1.bf16.msra.mxu0 %v1054
        %1086 = vmatprep.subr.bf16.mxu0 0
        %1087 = vmatpush2.bf16.msra.mxu0 0
        %1088 = vmatprep.subr.bf16.mxu0 0
        %1089 = vmatpush2.bf16.msra.mxu0 0
        %1090 = vmatprep.subr.bf16.mxu0 0
        %1091 = vmatpush2.bf16.msra.mxu0 0
        %1092 = vmatprep.subr.bf16.mxu0 0
        %1093 = vmatpush2.bf16.msra.mxu0 0
        %1094 = vmatprep.subr.bf16.mxu0 0
        %1095 = vmatpush2.bf16.msra.mxu0 0
        %1096 = vmatprep.subr.bf16.mxu0 0
        %1097 = vmatpush2.bf16.msra.mxu0 0
        %1098 = vmatprep.subr.bf16.mxu0 0
        %1099 = vmatpush2.bf16.msra.mxu0 0
        %1100 = vmatprep.subr.bf16.mxu0 0
        %1101 = vmatpush2.bf16.msra.mxu0 0
        %1102 = vmatprep.mubr.bf16.mxu0 0
        %1103 = vmatmul.mubr.bf16.gmra.mxu0 %v544
        %v1104 = vpop.f32.mrf.mxu0
        %v1105 = vadd.f32 0.0, %v1104
        %v1106 = vpop.f32.mrf.mxu0
        %v1107 = vpop.f32.mrf.mxu0
        %v1108 = vadd.f32 0.0, %v1107
        %v1109 = vpop.f32.mrf.mxu0
        %1110 = vmatprep.mubr.bf16.mxu0 0
        %1111 = vmatmul.mubr.bf16.gmra.mxu0 %v545
        %v1112 = vpop.f32.mrf.mxu0
        %v1113 = vadd.f32 0.0, %v1112
        %v1114 = vpop.f32.mrf.mxu0
        %v1115 = vpop.f32.mrf.mxu0
        %v1116 = vadd.f32 0.0, %v1115
        %v1117 = vpop.f32.mrf.mxu0
        %1118 = vmatprep.mubr.bf16.mxu0 0
        %1119 = vmatmul.mubr.bf16.gmra.mxu0 %v546
        %v1120 = vpop.f32.mrf.mxu0
        %v1121 = vadd.f32 0.0, %v1120
        %v1122 = vpop.f32.mrf.mxu0
        %v1123 = vpop.f32.mrf.mxu0
        %v1124 = vadd.f32 0.0, %v1123
        %v1125 = vpop.f32.mrf.mxu0
        %1126 = vmatprep.mubr.bf16.mxu0 0
        %1127 = vmatmul.mubr.bf16.gmra.mxu0 %v547
        %v1128 = vpop.f32.mrf.mxu0
        %v1129 = vadd.f32 0.0, %v1128
        %v1130 = vpop.f32.mrf.mxu0
        %v1131 = vpop.f32.mrf.mxu0
        %v1132 = vadd.f32 0.0, %v1131
        %v1133 = vpop.f32.mrf.mxu0
        %1134 = vmatprep.mubr.bf16.mxu0 0
        %1135 = vmatmul.mubr.bf16.gmra.mxu0 %v548
        %v1136 = vpop.f32.mrf.mxu0
        %v1137 = vadd.f32 0.0, %v1136
        %v1138 = vpop.f32.mrf.mxu0
        %v1139 = vpop.f32.mrf.mxu0
        %v1140 = vadd.f32 0.0, %v1139
        %v1141 = vpop.f32.mrf.mxu0
        %1142 = vmatprep.mubr.bf16.mxu0 0
        %1143 = vmatmul.mubr.bf16.gmra.mxu0 %v549
        %v1144 = vpop.f32.mrf.mxu0
        %v1145 = vadd.f32 0.0, %v1144
        %v1146 = vpop.f32.mrf.mxu0
        %v1147 = vpop.f32.mrf.mxu0
        %v1148 = vadd.f32 0.0, %v1147
        %v1149 = vpop.f32.mrf.mxu0
        %1150 = vmatprep.mubr.bf16.mxu0 0
        %1151 = vmatmul.mubr.bf16.gmra.mxu0 %v550
        %v1152 = vpop.f32.mrf.mxu0
        %v1153 = vadd.f32 0.0, %v1152
        %v1154 = vpop.f32.mrf.mxu0
        %v1155 = vpop.f32.mrf.mxu0
        %v1156 = vadd.f32 0.0, %v1155
        %v1157 = vpop.f32.mrf.mxu0
        %1158 = vmatprep.mubr.bf16.mxu0 0
        %1159 = vmatmul.mubr.bf16.gmra.mxu0 %v551
        %v1160 = vpop.f32.mrf.mxu0
        %v1161 = vadd.f32 0.0, %v1160
        %v1162 = vpop.f32.mrf.mxu0
        %v1163 = vpop.f32.mrf.mxu0
        %v1164 = vadd.f32 0.0, %v1163
        %v1165 = vpop.f32.mrf.mxu0
        %1166 = vmatprep.mubr.bf16.mxu0 0
        %1167 = vmatmul.mubr.bf16.gmra.mxu0 %v552
        %v1168 = vpop.f32.mrf.mxu0
        %v1169 = vadd.f32 0.0, %v1168
        %v1170 = vpop.f32.mrf.mxu0
        %v1171 = vpop.f32.mrf.mxu0
        %v1172 = vadd.f32 0.0, %v1171
        %v1173 = vpop.f32.mrf.mxu0
        %1174 = vmatprep.mubr.bf16.mxu0 0
        %1175 = vmatmul.mubr.bf16.gmra.mxu0 %v553
        %v1176 = vpop.f32.mrf.mxu0
        %v1177 = vadd.f32 0.0, %v1176
        %v1178 = vpop.f32.mrf.mxu0
        %v1179 = vpop.f32.mrf.mxu0
        %v1180 = vadd.f32 0.0, %v1179
        %v1181 = vpop.f32.mrf.mxu0
        %1182 = vmatprep.mubr.bf16.mxu0 0
        %1183 = vmatmul.mubr.bf16.gmra.mxu0 %v554
        %v1184 = vpop.f32.mrf.mxu0
        %v1185 = vadd.f32 0.0, %v1184
        %v1186 = vpop.f32.mrf.mxu0
        %v1187 = vpop.f32.mrf.mxu0
        %v1188 = vadd.f32 0.0, %v1187
        %v1189 = vpop.f32.mrf.mxu0
        %1190 = vmatprep.mubr.bf16.mxu0 0
        %1191 = vmatmul.mubr.bf16.gmra.mxu0 %v555
        %v1192 = vpop.f32.mrf.mxu0
        %v1193 = vadd.f32 0.0, %v1192
        %v1194 = vpop.f32.mrf.mxu0
        %v1195 = vpop.f32.mrf.mxu0
        %v1196 = vadd.f32 0.0, %v1195
        %v1197 = vpop.f32.mrf.mxu0
        %1198 = vmatprep.mubr.bf16.mxu0 0
        %1199 = vmatmul.mubr.bf16.gmra.mxu0 %v556
        %v1200 = vpop.f32.mrf.mxu0
        %v1201 = vadd.f32 0.0, %v1200
        %v1202 = vpop.f32.mrf.mxu0
        %v1203 = vpop.f32.mrf.mxu0
        %v1204 = vadd.f32 0.0, %v1203
        %v1205 = vpop.f32.mrf.mxu0
        %1206 = vmatprep.mubr.bf16.mxu0 0
        %1207 = vmatmul.mubr.bf16.gmra.mxu0 %v557
        %v1208 = vpop.f32.mrf.mxu0
        %v1209 = vadd.f32 0.0, %v1208
        %v1210 = vpop.f32.mrf.mxu0
        %v1211 = vpop.f32.mrf.mxu0
        %v1212 = vadd.f32 0.0, %v1211
        %v1213 = vpop.f32.mrf.mxu0
        %1214 = vmatprep.mubr.bf16.mxu0 0
        %1215 = vmatmul.mubr.bf16.gmra.mxu0 %v558
        %v1216 = vpop.f32.mrf.mxu0
        %v1217 = vadd.f32 0.0, %v1216
        %v1218 = vpop.f32.mrf.mxu0
        %v1219 = vpop.f32.mrf.mxu0
        %v1220 = vadd.f32 0.0, %v1219
        %v1221 = vpop.f32.mrf.mxu0
        %1222 = vmatprep.mubr.bf16.mxu0 0
        %1223 = vmatmul.mubr.bf16.gmra.mxu0 %v1020
        %v1224 = vpop.f32.mrf.mxu0
        %v1225 = vadd.f32 0.0, %v1224
        %v1226 = vpop.f32.mrf.mxu0
        %v1227 = vpop.f32.mrf.mxu0
        %v1228 = vadd.f32 0.0, %v1227
        %v1229 = vpop.f32.mrf.mxu0
        %1230 = vdwg.mxu0
        %v1231 = vadd.f32 %v873, %v1105
        %v1232 = vadd.f32 %v876, %v1108
        %v1233 = vadd.f32 %v881, %v1113
        %v1234 = vadd.f32 %v884, %v1116
        %v1235 = vadd.f32 %v889, %v1121
        %v1236 = vadd.f32 %v892, %v1124
        %v1237 = vadd.f32 %v897, %v1129
        %v1238 = vadd.f32 %v900, %v1132
        %v1239 = vadd.f32 %v905, %v1137
        %v1240 = vadd.f32 %v908, %v1140
        %v1241 = vadd.f32 %v913, %v1145
        %v1242 = vadd.f32 %v916, %v1148
        %v1243 = vadd.f32 %v921, %v1153
        %v1244 = vadd.f32 %v924, %v1156
        %v1245 = vadd.f32 %v929, %v1161
        %v1246 = vadd.f32 %v932, %v1164
        %v1247 = vadd.f32 %v937, %v1169
        %v1248 = vadd.f32 %v940, %v1172
        %v1249 = vadd.f32 %v945, %v1177
        %v1250 = vadd.f32 %v948, %v1180
        %v1251 = vadd.f32 %v953, %v1185
        %v1252 = vadd.f32 %v956, %v1188
        %v1253 = vadd.f32 %v961, %v1193
        %v1254 = vadd.f32 %v964, %v1196
        %v1255 = vadd.f32 %v969, %v1201
        %v1256 = vadd.f32 %v972, %v1204
        %v1257 = vadd.f32 %v977, %v1209
        %v1258 = vadd.f32 %v980, %v1212
        %v1259 = vadd.f32 %v985, %v1217
        %v1260 = vadd.f32 %v988, %v1220
        %v1261 = vadd.f32 %v993, %v1225
        %v1262 = vadd.f32 %v996, %v1228
        %v1263 = vld [vmem:[%s2] sm:$0x1]
        %v1265 = vlaneseq
        %v1266 = vshrl.u32 %v1265, 7
        %v1267 = vsub.s32 0, %v1266
        %v1268 = vrot.slane %v1263, %v1267
        %v1270 = vadd.f32 %v1231, %v1268
        %v1271 = vadd.f32 %v1232, %v1268
        %v1272 = vadd.f32 %v1233, %v1268
        %v1273 = vadd.f32 %v1234, %v1268
        %v1274 = vadd.f32 %v1235, %v1268
        %v1275 = vadd.f32 %v1236, %v1268
        %v1276 = vadd.f32 %v1237, %v1268
        %v1277 = vadd.f32 %v1238, %v1268
        %v1278 = vadd.f32 %v1239, %v1268
        %v1279 = vadd.f32 %v1240, %v1268
        %v1280 = vadd.f32 %v1241, %v1268
        %v1281 = vadd.f32 %v1242, %v1268
        %v1282 = vadd.f32 %v1243, %v1268
        %v1283 = vadd.f32 %v1244, %v1268
        %v1284 = vadd.f32 %v1245, %v1268
        %v1285 = vadd.f32 %v1246, %v1268
        %v1286 = vadd.f32 %v1247, %v1268
        %v1287 = vadd.f32 %v1248, %v1268
        %v1288 = vadd.f32 %v1249, %v1268
        %v1289 = vadd.f32 %v1250, %v1268
        %v1290 = vadd.f32 %v1251, %v1268
        %v1291 = vadd.f32 %v1252, %v1268
        %v1292 = vadd.f32 %v1253, %v1268
        %v1293 = vadd.f32 %v1254, %v1268
        %v1294 = vadd.f32 %v1255, %v1268
        %v1295 = vadd.f32 %v1256, %v1268
        %v1296 = vadd.f32 %v1257, %v1268
        %v1297 = vadd.f32 %v1258, %v1268
        %v1298 = vadd.f32 %v1259, %v1268
        %v1299 = vadd.f32 %v1260, %v1268
        %v1300 = vadd.f32 %v1261, %v1268
        %v1301 = vadd.f32 %v1262, %v1268
        %v1302 = vmax.f32 %v1270, 0.0
        %v1303 = vmax.f32 %v1271, 0.0
        %v1304 = vmax.f32 %v1272, 0.0
        %v1305 = vmax.f32 %v1273, 0.0
        %v1306 = vmax.f32 %v1274, 0.0
        %v1307 = vmax.f32 %v1275, 0.0
        %v1308 = vmax.f32 %v1276, 0.0
        %v1309 = vmax.f32 %v1277, 0.0
        %v1310 = vmax.f32 %v1278, 0.0
        %v1311 = vmax.f32 %v1279, 0.0
        %v1312 = vmax.f32 %v1280, 0.0
        %v1313 = vmax.f32 %v1281, 0.0
        %v1314 = vmax.f32 %v1282, 0.0
        %v1315 = vmax.f32 %v1283, 0.0
        %v1316 = vmax.f32 %v1284, 0.0
        %v1317 = vmax.f32 %v1285, 0.0
        %v1318 = vmax.f32 %v1286, 0.0
        %v1319 = vmax.f32 %v1287, 0.0
        %v1320 = vmax.f32 %v1288, 0.0
        %v1321 = vmax.f32 %v1289, 0.0
        %v1322 = vmax.f32 %v1290, 0.0
        %v1323 = vmax.f32 %v1291, 0.0
        %v1324 = vmax.f32 %v1292, 0.0
        %v1325 = vmax.f32 %v1293, 0.0
        %v1326 = vmax.f32 %v1294, 0.0
        %v1327 = vmax.f32 %v1295, 0.0
        %v1328 = vmax.f32 %v1296, 0.0
        %v1329 = vmax.f32 %v1297, 0.0
        %v1330 = vmax.f32 %v1298, 0.0
        %v1331 = vmax.f32 %v1299, 0.0
        %v1332 = vmax.f32 %v1300, 0.0
        %v1333 = vmax.f32 %v1301, 0.0
        %v1334 = vpack.c.bf16 %v1303, %v1302
        %v1335 = vpack.c.bf16 %v1305, %v1304
        %v1336 = vpack.c.bf16 %v1307, %v1306
        %v1337 = vpack.c.bf16 %v1309, %v1308
        %v1338 = vpack.c.bf16 %v1311, %v1310
        %v1339 = vpack.c.bf16 %v1313, %v1312
        %v1340 = vpack.c.bf16 %v1315, %v1314
        %v1341 = vpack.c.bf16 %v1317, %v1316
        %v1342 = vpack.c.bf16 %v1319, %v1318
        %v1343 = vpack.c.bf16 %v1321, %v1320
        %v1344 = vpack.c.bf16 %v1323, %v1322
        %v1345 = vpack.c.bf16 %v1325, %v1324
        %v1346 = vpack.c.bf16 %v1327, %v1326
        %v1347 = vpack.c.bf16 %v1329, %v1328
        %v1348 = vpack.c.bf16 %v1331, %v1330
        %v1349 = vpack.c.bf16 %v1333, %v1332
        %v1350 = vld [vmem:[#allocation7] sm:$0xf]
        %v1351 = vld [vmem:[#allocation7 + $0x4] sm:$0xf]
        %v1352 = vld [vmem:[#allocation7 + $0x8] sm:$0xf]
        %v1353 = vld [vmem:[#allocation7 + $0xc] sm:$0xf]
        %v1354 = vld [vmem:[#allocation7 + $0x10] sm:$0xf]
        %v1355 = vld [vmem:[#allocation7 + $0x14] sm:$0xf]
        %v1356 = vld [vmem:[#allocation7 + $0x18] sm:$0xf]
        %v1357 = vld [vmem:[#allocation7 + $0x1c] sm:$0xf]
        %v1358 = vld [vmem:[#allocation7 + $0x20] sm:$0xf]
        %v1359 = vld [vmem:[#allocation7 + $0x24] sm:$0xf]
        %v1360 = vld [vmem:[#allocation7 + $0x28] sm:$0xf]
        %v1361 = vld [vmem:[#allocation7 + $0x2c] sm:$0xf]
        %v1362 = vld [vmem:[#allocation7 + $0x30] sm:$0xf]
        %v1363 = vld [vmem:[#allocation7 + $0x34] sm:$0xf]
        %v1364 = vld [vmem:[#allocation7 + $0x38] sm:$0xf]
        %v1365 = vld [vmem:[#allocation7 + $0x3c] sm:$0xf]
        %v1366 = vld [vmem:[%s4] sm:$0x1]
        %v1368 = vlaneseq
        %v1369 = vshrl.u32 %v1368, 7
        %v1370 = vsub.s32 0, %v1369
        %v1371 = vrot.slane %v1366, %v1370
        %v1389 = vunpack.c.l.b16 %v1350
        %v1390 = vunpack.c.l.b16 %v1351
        %v1391 = vunpack.c.l.b16 %v1352
        %v1392 = vunpack.c.l.b16 %v1353
        %v1393 = vunpack.c.l.b16 %v1354
        %v1394 = vunpack.c.l.b16 %v1355
        %v1395 = vunpack.c.l.b16 %v1356
        %v1396 = vunpack.c.l.b16 %v1357
        %v1397 = vunpack.c.l.b16 %v1358
        %v1398 = vunpack.c.l.b16 %v1359
        %v1399 = vunpack.c.l.b16 %v1360
        %v1400 = vunpack.c.l.b16 %v1361
        %v1401 = vunpack.c.l.b16 %v1362
        %v1402 = vunpack.c.l.b16 %v1363
        %v1403 = vunpack.c.l.b16 %v1364
        %v1404 = vunpack.c.l.b16 %v1365
        %v1405 = vpack.c.b16 %v1390, %v1389
        %v1406 = vpack.c.b16 %v1392, %v1391
        %v1407 = vpack.c.b16 %v1394, %v1393
        %v1408 = vpack.c.b16 %v1396, %v1395
        %v1409 = vpack.c.b16 %v1398, %v1397
        %v1410 = vpack.c.b16 %v1400, %v1399
        %v1411 = vpack.c.b16 %v1402, %v1401
        %v1412 = vpack.c.b16 %v1404, %v1403
        %1421 = vmatprep.subr.bf16.mxu0 0
        %1422 = vmatpush1.bf16.msra.mxu0 %v1412
        %1423 = vmatprep.subr.bf16.mxu0 0
        %1424 = vmatpush1.bf16.msra.mxu0 %v1411
        %1425 = vmatprep.subr.bf16.mxu0 0
        %1426 = vmatpush1.bf16.msra.mxu0 %v1410
        %1427 = vmatprep.subr.bf16.mxu0 0
        %1428 = vmatpush1.bf16.msra.mxu0 %v1409
        %1429 = vmatprep.subr.bf16.mxu0 0
        %1430 = vmatpush1.bf16.msra.mxu0 %v1408
        %1431 = vmatprep.subr.bf16.mxu0 0
        %1432 = vmatpush1.bf16.msra.mxu0 %v1407
        %1433 = vmatprep.subr.bf16.mxu0 0
        %1434 = vmatpush1.bf16.msra.mxu0 %v1406
        %1435 = vmatprep.subr.bf16.mxu0 0
        %1436 = vmatpush1.bf16.msra.mxu0 %v1405
        %1437 = vmatprep.subr.bf16.mxu0 0
        %1438 = vmatpush2.bf16.msra.mxu0 0
        %1439 = vmatprep.subr.bf16.mxu0 0
        %1440 = vmatpush2.bf16.msra.mxu0 0
        %1441 = vmatprep.subr.bf16.mxu0 0
        %1442 = vmatpush2.bf16.msra.mxu0 0
        %1443 = vmatprep.subr.bf16.mxu0 0
        %1444 = vmatpush2.bf16.msra.mxu0 0
        %1445 = vmatprep.subr.bf16.mxu0 0
        %1446 = vmatpush2.bf16.msra.mxu0 0
        %1447 = vmatprep.subr.bf16.mxu0 0
        %1448 = vmatpush2.bf16.msra.mxu0 0
        %1449 = vmatprep.subr.bf16.mxu0 0
        %1450 = vmatpush2.bf16.msra.mxu0 0
        %1451 = vmatprep.subr.bf16.mxu0 0
        %1452 = vmatpush2.bf16.msra.mxu0 0
        %1453 = vmatprep.mubr.bf16.mxu0 0
        %1454 = vmatmul.mubr.bf16.gmra.mxu0 %v1334
        %v1455 = vpop.f32.mrf.mxu0
        %v1456 = vadd.f32 %v1371, %v1455
        %v1457 = vpop.f32.mrf.mxu0
        %v1458 = vpop.f32.mrf.mxu0
        %v1459 = vadd.f32 %v1371, %v1458
        %v1460 = vpop.f32.mrf.mxu0
        %1461 = vmatprep.mubr.bf16.mxu0 0
        %1462 = vmatmul.mubr.bf16.gmra.mxu0 %v1335
        %v1463 = vpop.f32.mrf.mxu0
        %v1464 = vadd.f32 %v1371, %v1463
        %v1465 = vpop.f32.mrf.mxu0
        %v1466 = vpop.f32.mrf.mxu0
        %v1467 = vadd.f32 %v1371, %v1466
        %v1468 = vpop.f32.mrf.mxu0
        %1469 = vmatprep.mubr.bf16.mxu0 0
        %1470 = vmatmul.mubr.bf16.gmra.mxu0 %v1336
        %v1471 = vpop.f32.mrf.mxu0
        %v1472 = vadd.f32 %v1371, %v1471
        %v1473 = vpop.f32.mrf.mxu0
        %v1474 = vpop.f32.mrf.mxu0
        %v1475 = vadd.f32 %v1371, %v1474
        %v1476 = vpop.f32.mrf.mxu0
        %1477 = vmatprep.mubr.bf16.mxu0 0
        %1478 = vmatmul.mubr.bf16.gmra.mxu0 %v1337
        %v1479 = vpop.f32.mrf.mxu0
        %v1480 = vadd.f32 %v1371, %v1479
        %v1481 = vpop.f32.mrf.mxu0
        %v1482 = vpop.f32.mrf.mxu0
        %v1483 = vadd.f32 %v1371, %v1482
        %v1484 = vpop.f32.mrf.mxu0
        %1485 = vmatprep.mubr.bf16.mxu0 0
        %1486 = vmatmul.mubr.bf16.gmra.mxu0 %v1338
        %v1487 = vpop.f32.mrf.mxu0
        %v1488 = vadd.f32 %v1371, %v1487
        %v1489 = vpop.f32.mrf.mxu0
        %v1490 = vpop.f32.mrf.mxu0
        %v1491 = vadd.f32 %v1371, %v1490
        %v1492 = vpop.f32.mrf.mxu0
        %1493 = vmatprep.mubr.bf16.mxu0 0
        %1494 = vmatmul.mubr.bf16.gmra.mxu0 %v1339
        %v1495 = vpop.f32.mrf.mxu0
        %v1496 = vadd.f32 %v1371, %v1495
        %v1497 = vpop.f32.mrf.mxu0
        %v1498 = vpop.f32.mrf.mxu0
        %v1499 = vadd.f32 %v1371, %v1498
        %v1500 = vpop.f32.mrf.mxu0
        %1501 = vmatprep.mubr.bf16.mxu0 0
        %1502 = vmatmul.mubr.bf16.gmra.mxu0 %v1340
        %v1503 = vpop.f32.mrf.mxu0
        %v1504 = vadd.f32 %v1371, %v1503
        %v1505 = vpop.f32.mrf.mxu0
        %v1506 = vpop.f32.mrf.mxu0
        %v1507 = vadd.f32 %v1371, %v1506
        %v1508 = vpop.f32.mrf.mxu0
        %1509 = vmatprep.mubr.bf16.mxu0 0
        %1510 = vmatmul.mubr.bf16.gmra.mxu0 %v1341
        %v1511 = vpop.f32.mrf.mxu0
        %v1512 = vadd.f32 %v1371, %v1511
        %v1513 = vpop.f32.mrf.mxu0
        %v1514 = vpop.f32.mrf.mxu0
        %v1515 = vadd.f32 %v1371, %v1514
        %v1516 = vpop.f32.mrf.mxu0
        %1517 = vmatprep.mubr.bf16.mxu0 0
        %1518 = vmatmul.mubr.bf16.gmra.mxu0 %v1342
        %v1519 = vpop.f32.mrf.mxu0
        %v1520 = vadd.f32 %v1371, %v1519
        %v1521 = vpop.f32.mrf.mxu0
        %v1522 = vpop.f32.mrf.mxu0
        %v1523 = vadd.f32 %v1371, %v1522
        %v1524 = vpop.f32.mrf.mxu0
        %1525 = vmatprep.mubr.bf16.mxu0 0
        %1526 = vmatmul.mubr.bf16.gmra.mxu0 %v1343
        %v1527 = vpop.f32.mrf.mxu0
        %v1528 = vadd.f32 %v1371, %v1527
        %v1529 = vpop.f32.mrf.mxu0
        %v1530 = vpop.f32.mrf.mxu0
        %v1531 = vadd.f32 %v1371, %v1530
        %v1532 = vpop.f32.mrf.mxu0
        %1533 = vmatprep.mubr.bf16.mxu0 0
        %1534 = vmatmul.mubr.bf16.gmra.mxu0 %v1344
        %v1535 = vpop.f32.mrf.mxu0
        %v1536 = vadd.f32 %v1371, %v1535
        %v1537 = vpop.f32.mrf.mxu0
        %v1538 = vpop.f32.mrf.mxu0
        %v1539 = vadd.f32 %v1371, %v1538
        %v1540 = vpop.f32.mrf.mxu0
        %1541 = vmatprep.mubr.bf16.mxu0 0
        %1542 = vmatmul.mubr.bf16.gmra.mxu0 %v1345
        %v1543 = vpop.f32.mrf.mxu0
        %v1544 = vadd.f32 %v1371, %v1543
        %v1545 = vpop.f32.mrf.mxu0
        %v1546 = vpop.f32.mrf.mxu0
        %v1547 = vadd.f32 %v1371, %v1546
        %v1548 = vpop.f32.mrf.mxu0
        %1549 = vmatprep.mubr.bf16.mxu0 0
        %1550 = vmatmul.mubr.bf16.gmra.mxu0 %v1346
        %v1551 = vpop.f32.mrf.mxu0
        %v1552 = vadd.f32 %v1371, %v1551
        %v1553 = vpop.f32.mrf.mxu0
        %v1554 = vpop.f32.mrf.mxu0
        %v1555 = vadd.f32 %v1371, %v1554
        %v1556 = vpop.f32.mrf.mxu0
        %1557 = vmatprep.mubr.bf16.mxu0 0
        %1558 = vmatmul.mubr.bf16.gmra.mxu0 %v1347
        %v1559 = vpop.f32.mrf.mxu0
        %v1560 = vadd.f32 %v1371, %v1559
        %v1561 = vpop.f32.mrf.mxu0
        %v1562 = vpop.f32.mrf.mxu0
        %v1563 = vadd.f32 %v1371, %v1562
        %v1564 = vpop.f32.mrf.mxu0
        %1565 = vmatprep.mubr.bf16.mxu0 0
        %1566 = vmatmul.mubr.bf16.gmra.mxu0 %v1348
        %v1567 = vpop.f32.mrf.mxu0
        %v1568 = vadd.f32 %v1371, %v1567
        %v1569 = vpop.f32.mrf.mxu0
        %v1570 = vpop.f32.mrf.mxu0
        %v1571 = vadd.f32 %v1371, %v1570
        %v1572 = vpop.f32.mrf.mxu0
        %1573 = vmatprep.mubr.bf16.mxu0 0
        %1574 = vmatmul.mubr.bf16.gmra.mxu0 %v1349
        %v1575 = vpop.f32.mrf.mxu0
        %v1576 = vadd.f32 %v1371, %v1575
        %v1577 = vpop.f32.mrf.mxu0
        %v1578 = vpop.f32.mrf.mxu0
        %v1579 = vadd.f32 %v1371, %v1578
        %v1580 = vpop.f32.mrf.mxu0
        %1581 = vdwg.mxu0
        %v1582 = vadd.f32 %v1456, %v1459
        %v1583 = vadd.f32 %v1582, %v1464
        %v1584 = vadd.f32 %v1583, %v1467
        %v1585 = vadd.f32 %v1584, %v1472
        %v1586 = vadd.f32 %v1585, %v1475
        %v1587 = vadd.f32 %v1586, %v1480
        %v1588 = vadd.f32 %v1587, %v1483
        %v1589 = vadd.f32 %v1588, %v1488
        %v1590 = vadd.f32 %v1589, %v1491
        %v1591 = vadd.f32 %v1590, %v1496
        %v1592 = vadd.f32 %v1591, %v1499
        %v1593 = vadd.f32 %v1592, %v1504
        %v1594 = vadd.f32 %v1593, %v1507
        %v1595 = vadd.f32 %v1594, %v1512
        %v1596 = vadd.f32 %v1595, %v1515
        %v1597 = vadd.f32 %v1596, %v1520
        %v1598 = vadd.f32 %v1597, %v1523
        %v1599 = vadd.f32 %v1598, %v1528
        %v1600 = vadd.f32 %v1599, %v1531
        %v1601 = vadd.f32 %v1600, %v1536
        %v1602 = vadd.f32 %v1601, %v1539
        %v1603 = vadd.f32 %v1602, %v1544
        %v1604 = vadd.f32 %v1603, %v1547
        %v1605 = vadd.f32 %v1604, %v1552
        %v1606 = vadd.f32 %v1605, %v1555
        %v1607 = vadd.f32 %v1606, %v1560
        %v1608 = vadd.f32 %v1607, %v1563
        %v1609 = vadd.f32 %v1608, %v1568
        %v1610 = vadd.f32 %v1609, %v1571
        %v1611 = vadd.f32 %v1610, %v1576
        %v1612 = vadd.f32 %v1611, %v1579
        %v1613 = vrot.slane %v1612, 4
        %v1614 = vadd.f32 %v1612, %v1613
        %v1615 = vrot.slane %v1614, 2
        %v1616 = vadd.f32 %v1614, %v1615
        %v1617 = vrot.slane %v1616, 1
        %v1618 = vadd.f32 %v1616, %v1617
        %v1619 = vrcp.pop 256.0
        %v1620 = vmul.f32 %v1618, %v1619
        %v1621 = vpack.c.bf16 %v1620, %v1620
        %v1622 = vld [vmem:[#allocation8] sm:$0xf]
        %v1623 = vld [vmem:[#allocation8 + $0x4] sm:$0xf]
        %v1624 = vld [vmem:[#allocation8 + $0x8] sm:$0xf]
        %v1625 = vld [vmem:[#allocation8 + $0xc] sm:$0xf]
        %v1626 = vld [vmem:[#allocation8 + $0x10] sm:$0xf]
        %v1627 = vld [vmem:[#allocation8 + $0x14] sm:$0xf]
        %v1628 = vld [vmem:[#allocation8 + $0x18] sm:$0xf]
        %v1629 = vld [vmem:[#allocation8 + $0x1c] sm:$0xf]
        %v1630 = vld [vmem:[#allocation8 + $0x20] sm:$0xf]
        %v1631 = vld [vmem:[#allocation8 + $0x24] sm:$0xf]
        %v1632 = vld [vmem:[#allocation8 + $0x28] sm:$0xf]
        %v1633 = vld [vmem:[#allocation8 + $0x2c] sm:$0xf]
        %v1634 = vld [vmem:[#allocation8 + $0x30] sm:$0xf]
        %v1635 = vld [vmem:[#allocation8 + $0x34] sm:$0xf]
        %v1636 = vld [vmem:[#allocation8 + $0x38] sm:$0xf]
        %v1637 = vld [vmem:[#allocation8 + $0x3c] sm:$0xf]
        %v1638 = vld [vmem:[%s6] sm:$0x1]
        %v1655 = vunpack.c.l.b16 %v1622
        %v1656 = vunpack.c.l.b16 %v1623
        %v1657 = vunpack.c.l.b16 %v1624
        %v1658 = vunpack.c.l.b16 %v1625
        %v1659 = vunpack.c.l.b16 %v1626
        %v1660 = vunpack.c.l.b16 %v1627
        %v1661 = vunpack.c.l.b16 %v1628
        %v1662 = vunpack.c.l.b16 %v1629
        %v1663 = vunpack.c.l.b16 %v1630
        %v1664 = vunpack.c.l.b16 %v1631
        %v1665 = vunpack.c.l.b16 %v1632
        %v1666 = vunpack.c.l.b16 %v1633
        %v1667 = vunpack.c.l.b16 %v1634
        %v1668 = vunpack.c.l.b16 %v1635
        %v1669 = vunpack.c.l.b16 %v1636
        %v1670 = vunpack.c.l.b16 %v1637
        %v1671 = vpack.c.b16 %v1656, %v1655
        %v1672 = vpack.c.b16 %v1658, %v1657
        %v1673 = vpack.c.b16 %v1660, %v1659
        %v1674 = vpack.c.b16 %v1662, %v1661
        %v1675 = vpack.c.b16 %v1664, %v1663
        %v1676 = vpack.c.b16 %v1666, %v1665
        %v1677 = vpack.c.b16 %v1668, %v1667
        %v1678 = vpack.c.b16 %v1670, %v1669
        %1687 = vmatprep.subr.bf16.mxu0 0
        %1688 = vmatpush1.bf16.msra.mxu0 %v1678
        %1689 = vmatprep.subr.bf16.mxu0 0
        %1690 = vmatpush1.bf16.msra.mxu0 %v1677
        %1691 = vmatprep.subr.bf16.mxu0 0
        %1692 = vmatpush1.bf16.msra.mxu0 %v1676
        %1693 = vmatprep.subr.bf16.mxu0 0
        %1694 = vmatpush1.bf16.msra.mxu0 %v1675
        %1695 = vmatprep.subr.bf16.mxu0 0
        %1696 = vmatpush1.bf16.msra.mxu0 %v1674
        %1697 = vmatprep.subr.bf16.mxu0 0
        %1698 = vmatpush1.bf16.msra.mxu0 %v1673
        %1699 = vmatprep.subr.bf16.mxu0 0
        %1700 = vmatpush1.bf16.msra.mxu0 %v1672
        %1701 = vmatprep.subr.bf16.mxu0 0
        %1702 = vmatpush1.bf16.msra.mxu0 %v1671
        %1703 = vmatprep.subr.bf16.mxu0 0
        %1704 = vmatpush2.bf16.msra.mxu0 0
        %1705 = vmatprep.subr.bf16.mxu0 0
        %1706 = vmatpush2.bf16.msra.mxu0 0
        %1707 = vmatprep.subr.bf16.mxu0 0
        %1708 = vmatpush2.bf16.msra.mxu0 0
        %1709 = vmatprep.subr.bf16.mxu0 0
        %1710 = vmatpush2.bf16.msra.mxu0 0
        %1711 = vmatprep.subr.bf16.mxu0 0
        %1712 = vmatpush2.bf16.msra.mxu0 0
        %1713 = vmatprep.subr.bf16.mxu0 0
        %1714 = vmatpush2.bf16.msra.mxu0 0
        %1715 = vmatprep.subr.bf16.mxu0 0
        %1716 = vmatpush2.bf16.msra.mxu0 0
        %1717 = vmatprep.subr.bf16.mxu0 0
        %1718 = vmatpush2.bf16.msra.mxu0 0
        %1719 = vmatprep.mubr.bf16.mxu0 0
        %1720 = vmatmul.mubr.bf16.gmra.mxu0 %v1621
        %v1721 = vpop.f32.mrf.mxu0
        %v1722 = vadd.f32 %v1638, %v1721
        %v1723 = vpop.f32.mrf.mxu0
        %v1724 = vpop.f32.mrf.mxu0
        %v1725 = vpop.f32.mrf.mxu0
        %1726 = vdwg.mxu0
        %v1727 = vmax.f32 %v1722, 0.0
        %v1728 = vxor.u32 %v1727, 2147483648
        %v1729 = vmul.f32 %v1728, 1.442695
        %v1730 = vpow.pop %v1729
        %v1731 = vadd.f32 %v1730, 1.0
        %v1732 = vrcp.pop %v1731
        %v1733 = vmul.f32 1.0, %v1732
        %v1734 = vpack.c.bf16 %v1459, %v1456
        %v1735 = vpack.c.bf16 %v1467, %v1464
        %v1736 = vpack.c.bf16 %v1475, %v1472
        %v1737 = vpack.c.bf16 %v1483, %v1480
        %v1738 = vpack.c.bf16 %v1491, %v1488
        %v1739 = vpack.c.bf16 %v1499, %v1496
        %v1740 = vpack.c.bf16 %v1507, %v1504
        %v1741 = vpack.c.bf16 %v1515, %v1512
        %v1742 = vpack.c.bf16 %v1523, %v1520
        %v1743 = vpack.c.bf16 %v1531, %v1528
        %v1744 = vpack.c.bf16 %v1539, %v1536
        %v1745 = vpack.c.bf16 %v1547, %v1544
        %v1746 = vpack.c.bf16 %v1555, %v1552
        %v1747 = vpack.c.bf16 %v1563, %v1560
        %v1748 = vpack.c.bf16 %v1571, %v1568
        %v1749 = vpack.c.bf16 %v1579, %v1576
        %v1750 = vld [vmem:[#allocation10] sm:$0xf]
        %v1751 = vld [vmem:[#allocation10 + $0x4] sm:$0xf]
        %v1752 = vld [vmem:[#allocation10 + $0x8] sm:$0xf]
        %v1753 = vld [vmem:[#allocation10 + $0xc] sm:$0xf]
        %v1754 = vld [vmem:[#allocation10 + $0x10] sm:$0xf]
        %v1755 = vld [vmem:[#allocation10 + $0x14] sm:$0xf]
        %v1756 = vld [vmem:[#allocation10 + $0x18] sm:$0xf]
        %v1757 = vld [vmem:[#allocation10 + $0x1c] sm:$0xf]
        %v1758 = vld [vmem:[#allocation10 + $0x20] sm:$0xf]
        %v1759 = vld [vmem:[#allocation10 + $0x24] sm:$0xf]
        %v1760 = vld [vmem:[#allocation10 + $0x28] sm:$0xf]
        %v1761 = vld [vmem:[#allocation10 + $0x2c] sm:$0xf]
        %v1762 = vld [vmem:[#allocation10 + $0x30] sm:$0xf]
        %v1763 = vld [vmem:[#allocation10 + $0x34] sm:$0xf]
        %v1764 = vld [vmem:[#allocation10 + $0x38] sm:$0xf]
        %v1765 = vld [vmem:[#allocation10 + $0x3c] sm:$0xf]
        %v1766 = vld [vmem:[%s8] sm:$0x1]
        %v1768 = vlaneseq
        %v1769 = vshrl.u32 %v1768, 7
        %v1770 = vsub.s32 0, %v1769
        %v1771 = vrot.slane %v1766, %v1770
        %v1789 = vunpack.c.l.b16 %v1750
        %v1790 = vunpack.c.l.b16 %v1751
        %v1791 = vunpack.c.l.b16 %v1752
        %v1792 = vunpack.c.l.b16 %v1753
        %v1793 = vunpack.c.l.b16 %v1754
        %v1794 = vunpack.c.l.b16 %v1755
        %v1795 = vunpack.c.l.b16 %v1756
        %v1796 = vunpack.c.l.b16 %v1757
        %v1797 = vunpack.c.l.b16 %v1758
        %v1798 = vunpack.c.l.b16 %v1759
        %v1799 = vunpack.c.l.b16 %v1760
        %v1800 = vunpack.c.l.b16 %v1761
        %v1801 = vunpack.c.l.b16 %v1762
        %v1802 = vunpack.c.l.b16 %v1763
        %v1803 = vunpack.c.l.b16 %v1764
        %v1804 = vunpack.c.l.b16 %v1765
        %v1805 = vpack.c.b16 %v1790, %v1789
        %v1806 = vpack.c.b16 %v1792, %v1791
        %v1807 = vpack.c.b16 %v1794, %v1793
        %v1808 = vpack.c.b16 %v1796, %v1795
        %v1809 = vpack.c.b16 %v1798, %v1797
        %v1810 = vpack.c.b16 %v1800, %v1799
        %v1811 = vpack.c.b16 %v1802, %v1801
        %v1812 = vpack.c.b16 %v1804, %v1803
        %1821 = vmatprep.subr.bf16.mxu0 0
        %1822 = vmatpush1.bf16.msra.mxu0 %v1812
        %1823 = vmatprep.subr.bf16.mxu0 0
        %1824 = vmatpush1.bf16.msra.mxu0 %v1811
        %1825 = vmatprep.subr.bf16.mxu0 0
        %1826 = vmatpush1.bf16.msra.mxu0 %v1810
        %1827 = vmatprep.subr.bf16.mxu0 0
        %1828 = vmatpush1.bf16.msra.mxu0 %v1809
        %1829 = vmatprep.subr.bf16.mxu0 0
        %1830 = vmatpush1.bf16.msra.mxu0 %v1808
        %1831 = vmatprep.subr.bf16.mxu0 0
        %1832 = vmatpush1.bf16.msra.mxu0 %v1807
        %1833 = vmatprep.subr.bf16.mxu0 0
        %1834 = vmatpush1.bf16.msra.mxu0 %v1806
        %1835 = vmatprep.subr.bf16.mxu0 0
        %1836 = vmatpush1.bf16.msra.mxu0 %v1805
        %1837 = vmatprep.subr.bf16.mxu0 0
        %1838 = vmatpush2.bf16.msra.mxu0 0
        %1839 = vmatprep.subr.bf16.mxu0 0
        %1840 = vmatpush2.bf16.msra.mxu0 0
        %1841 = vmatprep.subr.bf16.mxu0 0
        %1842 = vmatpush2.bf16.msra.mxu0 0
        %1843 = vmatprep.subr.bf16.mxu0 0
        %1844 = vmatpush2.bf16.msra.mxu0 0
        %1845 = vmatprep.subr.bf16.mxu0 0
        %1846 = vmatpush2.bf16.msra.mxu0 0
        %1847 = vmatprep.subr.bf16.mxu0 0
        %1848 = vmatpush2.bf16.msra.mxu0 0
        %1849 = vmatprep.subr.bf16.mxu0 0
        %1850 = vmatpush2.bf16.msra.mxu0 0
        %1851 = vmatprep.subr.bf16.mxu0 0
        %1852 = vmatpush2.bf16.msra.mxu0 0
        %1853 = vmatprep.mubr.bf16.mxu0 0
        %1854 = vmatmul.mubr.bf16.gmra.mxu0 %v1734
        %v1855 = vpop.f32.mrf.mxu0
        %v1856 = vadd.f32 %v1771, %v1855
        %v1857 = vpop.f32.mrf.mxu0
        %v1858 = vpop.f32.mrf.mxu0
        %v1859 = vadd.f32 %v1771, %v1858
        %v1860 = vpop.f32.mrf.mxu0
        %1861 = vmatprep.mubr.bf16.mxu0 0
        %1862 = vmatmul.mubr.bf16.gmra.mxu0 %v1735
        %v1863 = vpop.f32.mrf.mxu0
        %v1864 = vadd.f32 %v1771, %v1863
        %v1865 = vpop.f32.mrf.mxu0
        %v1866 = vpop.f32.mrf.mxu0
        %v1867 = vadd.f32 %v1771, %v1866
        %v1868 = vpop.f32.mrf.mxu0
        %1869 = vmatprep.mubr.bf16.mxu0 0
        %1870 = vmatmul.mubr.bf16.gmra.mxu0 %v1736
        %v1871 = vpop.f32.mrf.mxu0
        %v1872 = vadd.f32 %v1771, %v1871
        %v1873 = vpop.f32.mrf.mxu0
        %v1874 = vpop.f32.mrf.mxu0
        %v1875 = vadd.f32 %v1771, %v1874
        %v1876 = vpop.f32.mrf.mxu0
        %1877 = vmatprep.mubr.bf16.mxu0 0
        %1878 = vmatmul.mubr.bf16.gmra.mxu0 %v1737
        %v1879 = vpop.f32.mrf.mxu0
        %v1880 = vadd.f32 %v1771, %v1879
        %v1881 = vpop.f32.mrf.mxu0
        %v1882 = vpop.f32.mrf.mxu0
        %v1883 = vadd.f32 %v1771, %v1882
        %v1884 = vpop.f32.mrf.mxu0
        %1885 = vmatprep.mubr.bf16.mxu0 0
        %1886 = vmatmul.mubr.bf16.gmra.mxu0 %v1738
        %v1887 = vpop.f32.mrf.mxu0
        %v1888 = vadd.f32 %v1771, %v1887
        %v1889 = vpop.f32.mrf.mxu0
        %v1890 = vpop.f32.mrf.mxu0
        %v1891 = vadd.f32 %v1771, %v1890
        %v1892 = vpop.f32.mrf.mxu0
        %1893 = vmatprep.mubr.bf16.mxu0 0
        %1894 = vmatmul.mubr.bf16.gmra.mxu0 %v1739
        %v1895 = vpop.f32.mrf.mxu0
        %v1896 = vadd.f32 %v1771, %v1895
        %v1897 = vpop.f32.mrf.mxu0
        %v1898 = vpop.f32.mrf.mxu0
        %v1899 = vadd.f32 %v1771, %v1898
        %v1900 = vpop.f32.mrf.mxu0
        %1901 = vmatprep.mubr.bf16.mxu0 0
        %1902 = vmatmul.mubr.bf16.gmra.mxu0 %v1740
        %v1903 = vpop.f32.mrf.mxu0
        %v1904 = vadd.f32 %v1771, %v1903
        %v1905 = vpop.f32.mrf.mxu0
        %v1906 = vpop.f32.mrf.mxu0
        %v1907 = vadd.f32 %v1771, %v1906
        %v1908 = vpop.f32.mrf.mxu0
        %1909 = vmatprep.mubr.bf16.mxu0 0
        %1910 = vmatmul.mubr.bf16.gmra.mxu0 %v1741
        %v1911 = vpop.f32.mrf.mxu0
        %v1912 = vadd.f32 %v1771, %v1911
        %v1913 = vpop.f32.mrf.mxu0
        %v1914 = vpop.f32.mrf.mxu0
        %v1915 = vadd.f32 %v1771, %v1914
        %v1916 = vpop.f32.mrf.mxu0
        %1917 = vmatprep.mubr.bf16.mxu0 0
        %1918 = vmatmul.mubr.bf16.gmra.mxu0 %v1742
        %v1919 = vpop.f32.mrf.mxu0
        %v1920 = vadd.f32 %v1771, %v1919
        %v1921 = vpop.f32.mrf.mxu0
        %v1922 = vpop.f32.mrf.mxu0
        %v1923 = vadd.f32 %v1771, %v1922
        %v1924 = vpop.f32.mrf.mxu0
        %1925 = vmatprep.mubr.bf16.mxu0 0
        %1926 = vmatmul.mubr.bf16.gmra.mxu0 %v1743
        %v1927 = vpop.f32.mrf.mxu0
        %v1928 = vadd.f32 %v1771, %v1927
        %v1929 = vpop.f32.mrf.mxu0
        %v1930 = vpop.f32.mrf.mxu0
        %v1931 = vadd.f32 %v1771, %v1930
        %v1932 = vpop.f32.mrf.mxu0
        %1933 = vmatprep.mubr.bf16.mxu0 0
        %1934 = vmatmul.mubr.bf16.gmra.mxu0 %v1744
        %v1935 = vpop.f32.mrf.mxu0
        %v1936 = vadd.f32 %v1771, %v1935
        %v1937 = vpop.f32.mrf.mxu0
        %v1938 = vpop.f32.mrf.mxu0
        %v1939 = vadd.f32 %v1771, %v1938
        %v1940 = vpop.f32.mrf.mxu0
        %1941 = vmatprep.mubr.bf16.mxu0 0
        %1942 = vmatmul.mubr.bf16.gmra.mxu0 %v1745
        %v1943 = vpop.f32.mrf.mxu0
        %v1944 = vadd.f32 %v1771, %v1943
        %v1945 = vpop.f32.mrf.mxu0
        %v1946 = vpop.f32.mrf.mxu0
        %v1947 = vadd.f32 %v1771, %v1946
        %v1948 = vpop.f32.mrf.mxu0
        %1949 = vmatprep.mubr.bf16.mxu0 0
        %1950 = vmatmul.mubr.bf16.gmra.mxu0 %v1746
        %v1951 = vpop.f32.mrf.mxu0
        %v1952 = vadd.f32 %v1771, %v1951
        %v1953 = vpop.f32.mrf.mxu0
        %v1954 = vpop.f32.mrf.mxu0
        %v1955 = vadd.f32 %v1771, %v1954
        %v1956 = vpop.f32.mrf.mxu0
        %1957 = vmatprep.mubr.bf16.mxu0 0
        %1958 = vmatmul.mubr.bf16.gmra.mxu0 %v1747
        %v1959 = vpop.f32.mrf.mxu0
        %v1960 = vadd.f32 %v1771, %v1959
        %v1961 = vpop.f32.mrf.mxu0
        %v1962 = vpop.f32.mrf.mxu0
        %v1963 = vadd.f32 %v1771, %v1962
        %v1964 = vpop.f32.mrf.mxu0
        %1965 = vmatprep.mubr.bf16.mxu0 0
        %1966 = vmatmul.mubr.bf16.gmra.mxu0 %v1748
        %v1967 = vpop.f32.mrf.mxu0
        %v1968 = vadd.f32 %v1771, %v1967
        %v1969 = vpop.f32.mrf.mxu0
        %v1970 = vpop.f32.mrf.mxu0
        %v1971 = vadd.f32 %v1771, %v1970
        %v1972 = vpop.f32.mrf.mxu0
        %1973 = vmatprep.mubr.bf16.mxu0 0
        %1974 = vmatmul.mubr.bf16.gmra.mxu0 %v1749
        %v1975 = vpop.f32.mrf.mxu0
        %v1976 = vadd.f32 %v1771, %v1975
        %v1977 = vpop.f32.mrf.mxu0
        %v1978 = vpop.f32.mrf.mxu0
        %v1979 = vadd.f32 %v1771, %v1978
        %v1980 = vpop.f32.mrf.mxu0
        %1981 = vdwg.mxu0
        %v1982 = vxor.u32 %v1856, 2147483648
        %v1983 = vxor.u32 %v1859, 2147483648
        %v1984 = vxor.u32 %v1864, 2147483648
        %v1985 = vxor.u32 %v1867, 2147483648
        %v1986 = vxor.u32 %v1872, 2147483648
        %v1987 = vxor.u32 %v1875, 2147483648
        %v1988 = vxor.u32 %v1880, 2147483648
        %v1989 = vxor.u32 %v1883, 2147483648
        %v1990 = vxor.u32 %v1888, 2147483648
        %v1991 = vxor.u32 %v1891, 2147483648
        %v1992 = vxor.u32 %v1896, 2147483648
        %v1993 = vxor.u32 %v1899, 2147483648
        %v1994 = vxor.u32 %v1904, 2147483648
        %v1995 = vxor.u32 %v1907, 2147483648
        %v1996 = vxor.u32 %v1912, 2147483648
        %v1997 = vxor.u32 %v1915, 2147483648
        %v1998 = vxor.u32 %v1920, 2147483648
        %v1999 = vxor.u32 %v1923, 2147483648
        %v2000 = vxor.u32 %v1928, 2147483648
        %v2001 = vxor.u32 %v1931, 2147483648
        %v2002 = vxor.u32 %v1936, 2147483648
        %v2003 = vxor.u32 %v1939, 2147483648
        %v2004 = vxor.u32 %v1944, 2147483648
        %v2005 = vxor.u32 %v1947, 2147483648
        %v2006 = vxor.u32 %v1952, 2147483648
        %v2007 = vxor.u32 %v1955, 2147483648
        %v2008 = vxor.u32 %v1960, 2147483648
        %v2009 = vxor.u32 %v1963, 2147483648
        %v2010 = vxor.u32 %v1968, 2147483648
        %v2011 = vxor.u32 %v1971, 2147483648
        %v2012 = vxor.u32 %v1976, 2147483648
        %v2013 = vxor.u32 %v1979, 2147483648
        %v2014 = vmul.f32 %v1982, 1.442695
        %v2015 = vpow.pop %v2014
        %v2016 = vmul.f32 %v1983, 1.442695
        %v2017 = vpow.pop %v2016
        %v2018 = vmul.f32 %v1984, 1.442695
        %v2019 = vpow.pop %v2018
        %v2020 = vmul.f32 %v1985, 1.442695
        %v2021 = vpow.pop %v2020
        %v2022 = vmul.f32 %v1986, 1.442695
        %v2023 = vpow.pop %v2022
        %v2024 = vmul.f32 %v1987, 1.442695
        %v2025 = vpow.pop %v2024
        %v2026 = vmul.f32 %v1988, 1.442695
        %v2027 = vpow.pop %v2026
        %v2028 = vmul.f32 %v1989, 1.442695
        %v2029 = vpow.pop %v2028
        %v2030 = vmul.f32 %v1990, 1.442695
        %v2031 = vpow.pop %v2030
        %v2032 = vmul.f32 %v1991, 1.442695
        %v2033 = vpow.pop %v2032
        %v2034 = vmul.f32 %v1992, 1.442695
        %v2035 = vpow.pop %v2034
        %v2036 = vmul.f32 %v1993, 1.442695
        %v2037 = vpow.pop %v2036
        %v2038 = vmul.f32 %v1994, 1.442695
        %v2039 = vpow.pop %v2038
        %v2040 = vmul.f32 %v1995, 1.442695
        %v2041 = vpow.pop %v2040
        %v2042 = vmul.f32 %v1996, 1.442695
        %v2043 = vpow.pop %v2042
        %v2044 = vmul.f32 %v1997, 1.442695
        %v2045 = vpow.pop %v2044
        %v2046 = vmul.f32 %v1998, 1.442695
        %v2047 = vpow.pop %v2046
        %v2048 = vmul.f32 %v1999, 1.442695
        %v2049 = vpow.pop %v2048
        %v2050 = vmul.f32 %v2000, 1.442695
        %v2051 = vpow.pop %v2050
        %v2052 = vmul.f32 %v2001, 1.442695
        %v2053 = vpow.pop %v2052
        %v2054 = vmul.f32 %v2002, 1.442695
        %v2055 = vpow.pop %v2054
        %v2056 = vmul.f32 %v2003, 1.442695
        %v2057 = vpow.pop %v2056
        %v2058 = vmul.f32 %v2004, 1.442695
        %v2059 = vpow.pop %v2058
        %v2060 = vmul.f32 %v2005, 1.442695
        %v2061 = vpow.pop %v2060
        %v2062 = vmul.f32 %v2006, 1.442695
        %v2063 = vpow.pop %v2062
        %v2064 = vmul.f32 %v2007, 1.442695
        %v2065 = vpow.pop %v2064
        %v2066 = vmul.f32 %v2008, 1.442695
        %v2067 = vpow.pop %v2066
        %v2068 = vmul.f32 %v2009, 1.442695
        %v2069 = vpow.pop %v2068
        %v2070 = vmul.f32 %v2010, 1.442695
        %v2071 = vpow.pop %v2070
        %v2072 = vmul.f32 %v2011, 1.442695
        %v2073 = vpow.pop %v2072
        %v2074 = vmul.f32 %v2012, 1.442695
        %v2075 = vpow.pop %v2074
        %v2076 = vmul.f32 %v2013, 1.442695
        %v2077 = vpow.pop %v2076
        %v2078 = vadd.f32 %v2015, 1.0
        %v2079 = vadd.f32 %v2017, 1.0
        %v2080 = vadd.f32 %v2019, 1.0
        %v2081 = vadd.f32 %v2021, 1.0
        %v2082 = vadd.f32 %v2023, 1.0
        %v2083 = vadd.f32 %v2025, 1.0
        %v2084 = vadd.f32 %v2027, 1.0
        %v2085 = vadd.f32 %v2029, 1.0
        %v2086 = vadd.f32 %v2031, 1.0
        %v2087 = vadd.f32 %v2033, 1.0
        %v2088 = vadd.f32 %v2035, 1.0
        %v2089 = vadd.f32 %v2037, 1.0
        %v2090 = vadd.f32 %v2039, 1.0
        %v2091 = vadd.f32 %v2041, 1.0
        %v2092 = vadd.f32 %v2043, 1.0
        %v2093 = vadd.f32 %v2045, 1.0
        %v2094 = vadd.f32 %v2047, 1.0
        %v2095 = vadd.f32 %v2049, 1.0
        %v2096 = vadd.f32 %v2051, 1.0
        %v2097 = vadd.f32 %v2053, 1.0
        %v2098 = vadd.f32 %v2055, 1.0
        %v2099 = vadd.f32 %v2057, 1.0
        %v2100 = vadd.f32 %v2059, 1.0
        %v2101 = vadd.f32 %v2061, 1.0
        %v2102 = vadd.f32 %v2063, 1.0
        %v2103 = vadd.f32 %v2065, 1.0
        %v2104 = vadd.f32 %v2067, 1.0
        %v2105 = vadd.f32 %v2069, 1.0
        %v2106 = vadd.f32 %v2071, 1.0
        %v2107 = vadd.f32 %v2073, 1.0
        %v2108 = vadd.f32 %v2075, 1.0
        %v2109 = vadd.f32 %v2077, 1.0
        %v2110 = vrcp.pop %v2078
        %v2111 = vmul.f32 1.0, %v2110
        %v2112 = vrcp.pop %v2079
        %v2113 = vmul.f32 1.0, %v2112
        %v2114 = vrcp.pop %v2080
        %v2115 = vmul.f32 1.0, %v2114
        %v2116 = vrcp.pop %v2081
        %v2117 = vmul.f32 1.0, %v2116
        %v2118 = vrcp.pop %v2082
        %v2119 = vmul.f32 1.0, %v2118
        %v2120 = vrcp.pop %v2083
        %v2121 = vmul.f32 1.0, %v2120
        %v2122 = vrcp.pop %v2084
        %v2123 = vmul.f32 1.0, %v2122
        %v2124 = vrcp.pop %v2085
        %v2125 = vmul.f32 1.0, %v2124
        %v2126 = vrcp.pop %v2086
        %v2127 = vmul.f32 1.0, %v2126
        %v2128 = vrcp.pop %v2087
        %v2129 = vmul.f32 1.0, %v2128
        %v2130 = vrcp.pop %v2088
        %v2131 = vmul.f32 1.0, %v2130
        %v2132 = vrcp.pop %v2089
        %v2133 = vmul.f32 1.0, %v2132
        %v2134 = vrcp.pop %v2090
        %v2135 = vmul.f32 1.0, %v2134
        %v2136 = vrcp.pop %v2091
        %v2137 = vmul.f32 1.0, %v2136
        %v2138 = vrcp.pop %v2092
        %v2139 = vmul.f32 1.0, %v2138
        %v2140 = vrcp.pop %v2093
        %v2141 = vmul.f32 1.0, %v2140
        %v2142 = vrcp.pop %v2094
        %v2143 = vmul.f32 1.0, %v2142
        %v2144 = vrcp.pop %v2095
        %v2145 = vmul.f32 1.0, %v2144
        %v2146 = vrcp.pop %v2096
        %v2147 = vmul.f32 1.0, %v2146
        %v2148 = vrcp.pop %v2097
        %v2149 = vmul.f32 1.0, %v2148
        %v2150 = vrcp.pop %v2098
        %v2151 = vmul.f32 1.0, %v2150
        %v2152 = vrcp.pop %v2099
        %v2153 = vmul.f32 1.0, %v2152
        %v2154 = vrcp.pop %v2100
        %v2155 = vmul.f32 1.0, %v2154
        %v2156 = vrcp.pop %v2101
        %v2157 = vmul.f32 1.0, %v2156
        %v2158 = vrcp.pop %v2102
        %v2159 = vmul.f32 1.0, %v2158
        %v2160 = vrcp.pop %v2103
        %v2161 = vmul.f32 1.0, %v2160
        %v2162 = vrcp.pop %v2104
        %v2163 = vmul.f32 1.0, %v2162
        %v2164 = vrcp.pop %v2105
        %v2165 = vmul.f32 1.0, %v2164
        %v2166 = vrcp.pop %v2106
        %v2167 = vmul.f32 1.0, %v2166
        %v2168 = vrcp.pop %v2107
        %v2169 = vmul.f32 1.0, %v2168
        %v2170 = vrcp.pop %v2108
        %v2171 = vmul.f32 1.0, %v2170
        %v2172 = vrcp.pop %v2109
        %v2173 = vmul.f32 1.0, %v2172
        %v2174 = vlaneseq
        %v2175 = vshrl.u32 %v2174, 7
        %v2176 = vsub.s32 0, %v2175
        %v2177 = vrot.slane %v1733, %v2176
        %v2178 = vadd.f32 %v2177, %v2111
        %v2179 = vadd.f32 %v2177, %v2113
        %v2180 = vadd.f32 %v2177, %v2115
        %v2181 = vadd.f32 %v2177, %v2117
        %v2182 = vadd.f32 %v2177, %v2119
        %v2183 = vadd.f32 %v2177, %v2121
        %v2184 = vadd.f32 %v2177, %v2123
        %v2185 = vadd.f32 %v2177, %v2125
        %v2186 = vadd.f32 %v2177, %v2127
        %v2187 = vadd.f32 %v2177, %v2129
        %v2188 = vadd.f32 %v2177, %v2131
        %v2189 = vadd.f32 %v2177, %v2133
        %v2190 = vadd.f32 %v2177, %v2135
        %v2191 = vadd.f32 %v2177, %v2137
        %v2192 = vadd.f32 %v2177, %v2139
        %v2193 = vadd.f32 %v2177, %v2141
        %v2194 = vadd.f32 %v2177, %v2143
        %v2195 = vadd.f32 %v2177, %v2145
        %v2196 = vadd.f32 %v2177, %v2147
        %v2197 = vadd.f32 %v2177, %v2149
        %v2198 = vadd.f32 %v2177, %v2151
        %v2199 = vadd.f32 %v2177, %v2153
        %v2200 = vadd.f32 %v2177, %v2155
        %v2201 = vadd.f32 %v2177, %v2157
        %v2202 = vadd.f32 %v2177, %v2159
        %v2203 = vadd.f32 %v2177, %v2161
        %v2204 = vadd.f32 %v2177, %v2163
        %v2205 = vadd.f32 %v2177, %v2165
        %v2206 = vadd.f32 %v2177, %v2167
        %v2207 = vadd.f32 %v2177, %v2169
        %v2208 = vadd.f32 %v2177, %v2171
        %v2209 = vadd.f32 %v2177, %v2173
        %v2210 = vmul.f32 %v1456, %v2178
        %v2211 = vmul.f32 %v1459, %v2179
        %v2212 = vmul.f32 %v1464, %v2180
        %v2213 = vmul.f32 %v1467, %v2181
        %v2214 = vmul.f32 %v1472, %v2182
        %v2215 = vmul.f32 %v1475, %v2183
        %v2216 = vmul.f32 %v1480, %v2184
        %v2217 = vmul.f32 %v1483, %v2185
        %v2218 = vmul.f32 %v1488, %v2186
        %v2219 = vmul.f32 %v1491, %v2187
        %v2220 = vmul.f32 %v1496, %v2188
        %v2221 = vmul.f32 %v1499, %v2189
        %v2222 = vmul.f32 %v1504, %v2190
        %v2223 = vmul.f32 %v1507, %v2191
        %v2224 = vmul.f32 %v1512, %v2192
        %v2225 = vmul.f32 %v1515, %v2193
        %v2226 = vmul.f32 %v1520, %v2194
        %v2227 = vmul.f32 %v1523, %v2195
        %v2228 = vmul.f32 %v1528, %v2196
        %v2229 = vmul.f32 %v1531, %v2197
        %v2230 = vmul.f32 %v1536, %v2198
        %v2231 = vmul.f32 %v1539, %v2199
        %v2232 = vmul.f32 %v1544, %v2200
        %v2233 = vmul.f32 %v1547, %v2201
        %v2234 = vmul.f32 %v1552, %v2202
        %v2235 = vmul.f32 %v1555, %v2203
        %v2236 = vmul.f32 %v1560, %v2204
        %v2237 = vmul.f32 %v1563, %v2205
        %v2238 = vmul.f32 %v1568, %v2206
        %v2239 = vmul.f32 %v1571, %v2207
        %v2240 = vmul.f32 %v1576, %v2208
        %v2241 = vmul.f32 %v1579, %v2209
        %2242 = vst [vmem:[%s408] sm:$0xff] %v2210
        %2243 = vst [vmem:[%s408 + $0x8] sm:$0xff] %v2211
        %2244 = vst [vmem:[%s408 + $0x10] sm:$0xff] %v2212
        %2245 = vst [vmem:[%s408 + $0x18] sm:$0xff] %v2213
        %2246 = vst [vmem:[%s408 + $0x20] sm:$0xff] %v2214
        %2247 = vst [vmem:[%s408 + $0x28] sm:$0xff] %v2215
        %2248 = vst [vmem:[%s408 + $0x30] sm:$0xff] %v2216
        %2249 = vst [vmem:[%s408 + $0x38] sm:$0xff] %v2217
        %2250 = vst [vmem:[%s408 + $0x40] sm:$0xff] %v2218
        %2251 = vst [vmem:[%s408 + $0x48] sm:$0xff] %v2219
        %2252 = vst [vmem:[%s408 + $0x50] sm:$0xff] %v2220
        %2253 = vst [vmem:[%s408 + $0x58] sm:$0xff] %v2221
        %2254 = vst [vmem:[%s408 + $0x60] sm:$0xff] %v2222
        %2255 = vst [vmem:[%s408 + $0x68] sm:$0xff] %v2223
        %2256 = vst [vmem:[%s408 + $0x70] sm:$0xff] %v2224
        %2257 = vst [vmem:[%s408 + $0x78] sm:$0xff] %v2225
        %2258 = vst [vmem:[%s408 + $0x80] sm:$0xff] %v2226
        %2259 = vst [vmem:[%s408 + $0x88] sm:$0xff] %v2227
        %2260 = vst [vmem:[%s408 + $0x90] sm:$0xff] %v2228
        %2261 = vst [vmem:[%s408 + $0x98] sm:$0xff] %v2229
        %2262 = vst [vmem:[%s408 + $0xa0] sm:$0xff] %v2230
        %2263 = vst [vmem:[%s408 + $0xa8] sm:$0xff] %v2231
        %2264 = vst [vmem:[%s408 + $0xb0] sm:$0xff] %v2232
        %2265 = vst [vmem:[%s408 + $0xb8] sm:$0xff] %v2233
        %2266 = vst [vmem:[%s408 + $0xc0] sm:$0xff] %v2234
        %2267 = vst [vmem:[%s408 + $0xc8] sm:$0xff] %v2235
        %2268 = vst [vmem:[%s408 + $0xd0] sm:$0xff] %v2236
        %2269 = vst [vmem:[%s408 + $0xd8] sm:$0xff] %v2237
        %2270 = vst [vmem:[%s408 + $0xe0] sm:$0xff] %v2238
        %2271 = vst [vmem:[%s408 + $0xe8] sm:$0xff] %v2239
        %2272 = vst [vmem:[%s408 + $0xf0] sm:$0xff] %v2240
        %2273 = vst [vmem:[%s408 + $0xf8] sm:$0xff] %v2241
        %s2274 = sand.u32 %s230, 1
        %s2275 = scalar_lea.sflag [#allocation4], %s2274
        %s2276 = sand.u32 %s230, 1
        %s2277 = smul.addr %s2276, 256
        %s2278 = scalar_lea.vmem [#allocation11], %s2277
        // Predicated region
        $region77: #{tpu_custom_call.1} parent=55 // pred_check
          %p2279 = pneg %p240
        $region78: #{tpu_custom_call.1} parent=55 // pred_check_branch
          %2281 = sbr.rel (%p2279) target = $region80
        $region79: #{tpu_custom_call.1} parent=55 // pred_region
          %s2283 = ssub.s32 4096, 4096
          %2284 = vsyncadd %s2275, %s2283
          %s2285 = smul.addr %s28, 32
          %s2286 = smul.addr %s2285, 128
          %s2287 = scalar_lea.hbm %s9, %s2286
          %s2288 = sshll.u32 %s2278, 4
          %s2289 = int_to_ptr.vmem [resolvable:$true] %s2288
          %2294 = dma.vmem_to_hbm [thread:$0]  %s2289, 4096, %s2287, %s2275, 128, 128, 8
        $region80: #{tpu_custom_call.1} parent=55 // pred_fallthru
          _
      $region56: #{tpu_custom_call.1} parent=5 // pred_fallthru
        _
      %p2295 = scmp.le.s32.totalorder 2, %s23
      // Predicated region
      $region81: #{tpu_custom_call.1} parent=5 // pred_check
        %p2296 = pneg %p2295
      $region82: #{tpu_custom_call.1} parent=5 // pred_check_branch
        %2298 = sbr.rel (%p2296) target = $region84
      $region83: #{tpu_custom_call.1} parent=5 // pred_region
        %s2299 = ssub.s32 %s23, 2
        // Predicated region
        $region85: #{tpu_custom_call.1} parent=83 // pred_check
          %p2300 = pneg %p246
        $region86: #{tpu_custom_call.1} parent=83 // pred_check_branch
          %2302 = sbr.rel (%p2300) target = $region88
        $region87: #{tpu_custom_call.1} parent=83 // pred_region
          %s2303 = sand.u32 %s231, 1
          %s2304 = scalar_lea.sflag [#allocation4], %s2303
          %s2305 = sand.u32 %s231, 1
          %s2306 = smul.addr %s2305, 256
          %s2307 = scalar_lea.vmem [#allocation11], %s2306
          %2308 = dma.done %s2304, 4096
        $region88: #{tpu_custom_call.1} parent=83 // pred_fallthru
          _
      $region84: #{tpu_custom_call.1} parent=5 // pred_fallthru
        _
    $region6: #{tpu_custom_call.1} parent=1 // loop_footer
      %s27 = sadd.s32 1, %s23
    $region7: #{tpu_custom_call.1} parent=1 // loop_footer_branch
      %22 = sbr.rel target = $region3
    $region8: #{tpu_custom_call.1} parent=1 // loop_exit
      _
    %2309 = vsyncpa [#allocation3], 1
    %s2310 = scalar_lea.sflag [#allocation3], 1
    %2311 = vsyncpa %s2310, 1
    %2312 = vsyncpa [#allocation6], 1
    %2313 = vsyncpa [#allocation9], 1
    %2314 = vsyncpa [#allocation4], 1
    %s2315 = scalar_lea.sflag [#allocation4], 1
    %2316 = vsyncpa %s2315, 1

</llo_original>
